<compile_context>
chip_gen: v6e
topology: v6e:2x2x1
jax: 0.10.0
libtpu: 0.0.40
codegen_flags: <defaults>
</compile_context>

<pallas_src>
import math

import jax
import jax.numpy as jnp
import numpy as np
from jax.experimental import pallas as pl
from jax.experimental.pallas import tpu as pltpu

# ----------------------------------------------------------------------------
# Small synthetic RoBERTa config
# ----------------------------------------------------------------------------
B = 2              # batch
S = 8              # sequence length
H = 32             # hidden size (== model.pooler.dense.out_features)
NUM_HEADS = 2
HEAD_DIM = H // NUM_HEADS
INTER = 64         # FFN intermediate size
NUM_LAYERS = 2
VOCAB = 100
MAX_POS = 64
TYPE_VOCAB = 2
PAD_IDX = 1
LN_EPS = 1e-5
NEG_BIG = -1e9

H2 = 2 * H                     # head input channels: cat(hidden[-1], hidden[-2])
LANE_PAD = 128                 # lane-dense padded output width (head/tail/seg = lanes 0..2)
WSLAB_COLS = 3 * H + H + INTER # [wqkv | wo | w1] packed along the lane axis
VSLAB_ROWS = 8                 # 8 per-layer bias/LN vectors, one per sublane row

# Native MXU input dtype (bf16 on v5e/v6e/v7x); f32 accumulation is kept everywhere.
MXU_DTYPE = jnp.bfloat16


# ----------------------------------------------------------------------------
# Traced helpers (used inside the Pallas kernel)
# ----------------------------------------------------------------------------
def _mm(a, b):
    return jnp.dot(a.astype(MXU_DTYPE), b.astype(MXU_DTYPE),
                   preferred_element_type=jnp.float32)


def _layer_norm(x, g, b):
    mu = jnp.mean(x, axis=-1, keepdims=True)
    var = jnp.mean(jnp.square(x - mu), axis=-1, keepdims=True)
    return (x - mu) * jax.lax.rsqrt(var + LN_EPS) * g + b


def _gelu_tanh(x):
    # TODO(synk): HF RoBERTa uses exact erf-GELU; tanh approximation used here.
    c = math.sqrt(2.0 / math.pi)
    return 0.5 * x * (1.0 + jnp.tanh(c * (x + 0.044715 * x * x * x)))


# ----------------------------------------------------------------------------
# Fused forward kernel. Grid = (batch_element "parallel", encoder_layer "arbitrary").
# Hidden state lives in a VMEM scratch across the layer axis.
# ----------------------------------------------------------------------------
def fused_forward_kernel(
        we_ref, pe_ref, te_ref, eg_ref, eb_ref,     # embeddings (S,H)x3, emb-LN (1,H)x2
        bias_ref,                                   # additive attention bias (1,S)
        wslab_ref, w2_ref, vslab_ref,               # per-layer packed weights (streamed)
        wh_ref, bh_ref,                             # fused lane-padded head weights
        stm_ref, tail_ref,                          # special-token masks (S,1)
        out_ref,                                    # (S, LANE_PAD) lane-dense logits slab
        h_ref):                                     # VMEM scratch (S,H): hidden state
    layer = pl.program_id(1)

    # ---- embedding sum + LayerNorm (only before the first encoder layer) ----
    @pl.when(layer == 0)
    def _init():
        x = we_ref[...] + pe_ref[...] + te_ref[...]
        h_ref[...] = _layer_norm(x, eg_ref[...], eb_ref[...])

    # ---- unpack this layer's weight slabs (3 DMAs per grid step) ----
    wsl = wslab_ref[...]                           # (H, 3H+H+INTER) bf16
    wqkv = wsl[:, :3 * H]
    wo = wsl[:, 3 * H:4 * H]
    w1 = wsl[:, 4 * H:]
    w2 = w2_ref[...]                               # (INTER, H) bf16
    vsl = vslab_ref[...]                           # (8, 128) f32
    bqkv = vsl[0:1, :3 * H]
    bo = vsl[1:2, :H]
    b1 = vsl[2:3, :INTER]
    b2 = vsl[3:4, :H]
    ln1g = vsl[4:5, :H]
    ln1b = vsl[5:6, :H]
    ln2g = vsl[6:7, :H]
    ln2b = vsl[7:8, :H]

    hf = h_ref[...]                                # == hidden_states[-2] at last layer

    # ---- self-attention: fused QKV matmul + head-batched einsums ----
    qkv = _mm(hf, wqkv) + bqkv                                          # (S, 3H) f32
    qkv_h = jnp.swapaxes(qkv.reshape(S, 3 * NUM_HEADS, HEAD_DIM), 0, 1) # (3*NH, S, HD)
    q = qkv_h[:NUM_HEADS].astype(MXU_DTYPE)
    k = qkv_h[NUM_HEADS:2 * NUM_HEADS].astype(MXU_DTYPE)
    v = qkv_h[2 * NUM_HEADS:].astype(MXU_DTYPE)

    s = jnp.einsum('hqd,hkd->hqk', q, k,
                   preferred_element_type=jnp.float32) * (1.0 / math.sqrt(HEAD_DIM))
    s = s + bias_ref[...]                          # (1,S) broadcasts over (head, query)
    m = jnp.max(s, axis=-1, keepdims=True)
    p = jnp.exp(s - m)
    p = p * pl.reciprocal(jnp.sum(p, axis=-1, keepdims=True), approx=True)
    ctx = jnp.einsum('hqk,hkd->hqd', p.astype(MXU_DTYPE), v,
                     preferred_element_type=jnp.float32)                # (NH, S, HD)
    ctx = jnp.swapaxes(ctx, 0, 1).reshape(S, H)

    attn = _mm(ctx, wo) + bo
    h1 = _layer_norm(hf + attn, ln1g, ln1b)

    # ---- FFN ----
    f = _gelu_tanh(_mm(h1, w1) + b1)
    h2 = _layer_norm(h1 + _mm(f, w2) + b2, ln2g, ln2b)
    h_ref[...] = h2

    # ---- fused heads on cat(hidden[-1], hidden[-2]); nn.Dropout(0.2) = identity ----
    @pl.when(layer == NUM_LAYERS - 1)
    def _heads():
        # cat(h2, hf) @ W  ==  h2 @ W[:H] + hf @ W[H:]   (no lane-axis concat)
        logits = _mm(h2, wh_ref[0:H, :]) + _mm(hf, wh_ref[H:H2, :]) + bh_ref[...]
        col = jax.lax.broadcasted_iota(jnp.int32, (S, LANE_PAD), 1)
        special = jnp.where(col == 0, stm_ref[...],
                            jnp.where(col == 1, tail_ref[...], 0))
        out_ref[...] = jnp.where(special == 0, logits, -jnp.inf)


# ----------------------------------------------------------------------------
# pallas_call wrapper
# ----------------------------------------------------------------------------
def _fused_call(kp, we, pe, te, attn_bias, stm3, tail3):
    args = (we, pe, te, kp['emb_ln_g'], kp['emb_ln_b'], attn_bias,
            kp['wslab'], kp['w2'], kp['vslab'],
            kp['wheads'], kp['bheads'], stm3, tail3)

    def batch3(shape):
        return pl.BlockSpec(shape, lambda b, l: (b, 0, 0))

    def layer3(shape):
        return pl.BlockSpec(shape, lambda b, l: (l, 0, 0))

    def const2(shape):
        return pl.BlockSpec(shape, lambda b, l: (0, 0))

    sq = pl.Squeezed()
    in_specs = [
        batch3((sq, S, H)), batch3((sq, S, H)), batch3((sq, S, H)),   # we, pe, te
        const2((1, H)), const2((1, H)),                               # emb LN g / b
        batch3((sq, 1, S)),                                           # attn bias [B,1,S]
        layer3((sq, H, WSLAB_COLS)),                                  # [wqkv | wo | w1]
        layer3((sq, INTER, H)),                                       # w2
        layer3((sq, VSLAB_ROWS, LANE_PAD)),                           # bias / LN vector slab
        const2((H2, LANE_PAD)), const2((1, LANE_PAD)),                # fused head w / b
        batch3((sq, S, 1)), batch3((sq, S, 1)),                       # stm, rolled stm
    ]
    out_spec = pl.BlockSpec((sq, S, LANE_PAD), lambda b, l: (b, 0, 0))

    per_layer_flops = (2 * S * H * 3 * H                 # fused QKV projection
                       + 4 * NUM_HEADS * S * S * HEAD_DIM  # scores + context
                       + 2 * S * H * H                   # output projection
                       + 4 * S * H * INTER)              # FFN
    flops = B * (NUM_LAYERS * per_layer_flops + 2 * S * H2 * LANE_PAD)
    transcend = B * NUM_LAYERS * (NUM_HEADS * S * S + S * INTER + NUM_HEADS * S)
    bytes_acc = sum(int(np.prod(a.shape)) * a.dtype.itemsize for a in args)
    bytes_acc += B * S * LANE_PAD * 4

    return pl.pallas_call(
        fused_forward_kernel,
        out_shape=jax.ShapeDtypeStruct((B, S, LANE_PAD), jnp.float32),
        grid_spec=pltpu.PrefetchScalarGridSpec(
            num_scalar_prefetch=0,
            grid=(B, NUM_LAYERS),
            in_specs=in_specs,
            out_specs=out_spec,
            scratch_shapes=[pltpu.VMEM((S, H), jnp.float32)]),
        compiler_params=pltpu.CompilerParams(
            dimension_semantics=("parallel", "arbitrary"),
            vmem_limit_bytes=48 * 1024 * 1024),           # headroom below v7x 64 MiB
        cost_estimate=pl.CostEstimate(flops=int(flops),
                                      transcendentals=int(transcend),
                                      bytes_accessed=int(bytes_acc)),
    )(*args)


# ----------------------------------------------------------------------------
# Forward pass (wrapper: embedding gathers + mask prep, everything else fused)
# ----------------------------------------------------------------------------
@jax.jit
def forward(kp, input_ids, attention_mask, token_type_ids, special_tokens_mask):
    # RoBERTa position ids: cumulative sum over non-pad tokens (+ padding_idx).
    nonpad = (input_ids != PAD_IDX).astype(jnp.int32)
    positions = jnp.cumsum(nonpad, axis=1) * nonpad + PAD_IDX
    # NOTE: embedding row gathers stay in XLA (jnp.take); an in-kernel DMA gather
    # via scalar prefetch is possible but not worth it at these sizes.
    we = jnp.take(kp['word_emb'], input_ids, axis=0)
    pe = jnp.take(kp['pos_emb'], positions, axis=0)
    te = jnp.take(kp['type_emb'], token_type_ids, axis=0)

    # Additive attention bias [B, 1, S]; broadcast over heads inside the kernel.
    attn_bias = (1.0 - attention_mask.astype(jnp.float32))[:, None, :] * NEG_BIG

    stm = special_tokens_mask.astype(jnp.int32)
    tail_stm = jnp.concatenate([stm[:, -1:], stm[:, :-1]], axis=1)
    stm3 = stm[:, :, None]        # [B, S, 1]
    tail3 = tail_stm[:, :, None]  # [B, S, 1]

    slab = _fused_call(kp, we, pe, te, attn_bias, stm3, tail3)   # [B, S, 128]
    logits_head = slab[:, :, 0]
    logits_tail = slab[:, :, 1]
    logits_seg = slab[:, :, 2]
    return logits_head, logits_tail, logits_seg


# ----------------------------------------------------------------------------
# Pure-JAX f32 reference (same math) for correctness check
# ----------------------------------------------------------------------------
def reference_forward(params, input_ids, attention_mask, token_type_ids,
                      special_tokens_mask):
    nonpad = (input_ids != PAD_IDX).astype(jnp.int32)
    positions = jnp.cumsum(nonpad, axis=1) * nonpad + PAD_IDX
    x = (jnp.take(params['word_emb'], input_ids, axis=0)
         + jnp.take(params['pos_emb'], positions, axis=0)
         + jnp.take(params['type_emb'], token_type_ids, axis=0))

    def ln(v, g, b):
        mu = v.mean(-1, keepdims=True)
        var = ((v - mu) ** 2).mean(-1, keepdims=True)
        return (v - mu) * jax.lax.rsqrt(var + LN_EPS) * g.reshape(-1) + b.reshape(-1)

    h = ln(x, params['emb_ln_g'], params['emb_ln_b'])
    hidden_states = [h]
    bias = (1.0 - attention_mask.astype(jnp.float32))[:, None, None, :] * NEG_BIG
    for lp in params['layers']:
        def proj(w, b_):
            return (h @ w + b_.reshape(-1)).reshape(
                B, S, NUM_HEADS, HEAD_DIM).transpose(0, 2, 1, 3)
        q, k, v = proj(lp['wq'], lp['bq']), proj(lp['wk'], lp['bk']), proj(lp['wv'], lp['bv'])
        s = jnp.einsum('bnqd,bnkd->bnqk', q, k) / math.sqrt(HEAD_DIM) + bias
        p = jax.nn.softmax(s, axis=-1)
        ctx = jnp.einsum('bnqk,bnkd->bnqd', p, v).transpose(0, 2, 1, 3).reshape(B, S, H)
        attn = ctx @ lp['wo'] + lp['bo'].reshape(-1)
        h1 = ln(h + attn, lp['ln1g'], lp['ln1b'])
        f = h1 @ lp['w1'] + lp['b1'].reshape(-1)
        c = math.sqrt(2.0 / math.pi)
        f = 0.5 * f * (1.0 + jnp.tanh(c * (f + 0.044715 * f ** 3)))
        f = f @ lp['w2'] + lp['b2'].reshape(-1)
        h = ln(h1 + f, lp['ln2g'], lp['ln2b'])
        hidden_states.append(h)

    feat = jnp.concatenate([hidden_states[-1], hidden_states[-2]], axis=-1)  # [B,S,2H]
    hp = params['heads']
    lh = (feat * hp['wh'].reshape(-1)).sum(-1) + hp['bh'].reshape(())
    lt = (feat * hp['wt'].reshape(-1)).sum(-1) + hp['bt'].reshape(())
    lseg = (feat * hp['ws'].reshape(-1)).sum(-1) + hp['bs'].reshape(())
    stm = special_tokens_mask.astype(jnp.int32)
    tail = jnp.concatenate([stm[:, -1:], stm[:, :-1]], axis=1)
    lh = jnp.where(stm == 0, lh, -jnp.inf)
    lt = jnp.where(tail == 0, lt, -jnp.inf)
    return lh, lt, lseg


# ----------------------------------------------------------------------------
# Deterministic parameter init + kernel-side packing (fused QKV / slab / heads)
# ----------------------------------------------------------------------------
def init_params(key):
    keys = iter(jax.random.split(key, 64))

    def nrm(shape):
        return 0.02 * jax.random.normal(next(keys), shape, dtype=jnp.float32)

    params = dict(
        word_emb=nrm((VOCAB, H)),
        pos_emb=nrm((MAX_POS, H)),
        type_emb=nrm((TYPE_VOCAB, H)),
        emb_ln_g=jnp.ones((1, H), jnp.float32),
        emb_ln_b=jnp.zeros((1, H), jnp.float32),
        layers=[],
    )
    for _ in range(NUM_LAYERS):
        params['layers'].append(dict(
            wq=nrm((H, H)), bq=jnp.zeros((1, H), jnp.float32),
            wk=nrm((H, H)), bk=jnp.zeros((1, H), jnp.float32),
            wv=nrm((H, H)), bv=jnp.zeros((1, H), jnp.float32),
            wo=nrm((H, H)), bo=jnp.zeros((1, H), jnp.float32),
            ln1g=jnp.ones((1, H), jnp.float32), ln1b=jnp.zeros((1, H), jnp.float32),
            w1=nrm((H, INTER)), b1=jnp.zeros((1, INTER), jnp.float32),
            w2=nrm((INTER, H)), b2=jnp.zeros((1, H), jnp.float32),
            ln2g=jnp.ones((1, H), jnp.float32), ln2b=jnp.zeros((1, H), jnp.float32),
        ))
    # Conv1d(2H, 1, 1) weight [1, 2H, 1] -> stored here as [1, 1, 2H]; bias scalar.
    params['heads'] = dict(
        wh=nrm((1, 1, H2)), bh=nrm((1, 1)),
        wt=nrm((1, 1, H2)), bt=nrm((1, 1)),
        ws=nrm((1, 1, H2)), bs=nrm((1, 1)),
    )
    return params


def pack_params(params):
    layers = params['layers']

    def mat_slab(lp):
        wqkv = jnp.concatenate([lp['wq'], lp['wk'], lp['wv']], axis=1)   # [H, 3H]
        return jnp.concatenate([wqkv, lp['wo'], lp['w1']], axis=1)       # [H, 3H+H+INTER]

    def vec_row(v):
        row = jnp.zeros((LANE_PAD,), jnp.float32)
        return row.at[:v.size].set(v.reshape(-1))

    def vec_slab(lp):
        bqkv = jnp.concatenate([lp['bq'], lp['bk'], lp['bv']], axis=1)
        rows = [bqkv, lp['bo'], lp['b1'], lp['b2'],
                lp['ln1g'], lp['ln1b'], lp['ln2g'], lp['ln2b']]
        return jnp.stack([vec_row(r) for r in rows])                      # [8, 128]

    hp = params['heads']
    wheads = jnp.zeros((H2, LANE_PAD), jnp.float32)
    wheads = wheads.at[:, 0].set(hp['wh'].reshape(-1))
    wheads = wheads.at[:, 1].set(hp['wt'].reshape(-1))
    wheads = wheads.at[:, 2].set(hp['ws'].reshape(-1))
    bheads = jnp.zeros((1, LANE_PAD), jnp.float32)
    bheads = bheads.at[0, 0].set(hp['bh'][0, 0])
    bheads = bheads.at[0, 1].set(hp['bt'][0, 0])
    bheads = bheads.at[0, 2].set(hp['bs'][0, 0])

    return dict(
        word_emb=params['word_emb'], pos_emb=params['pos_emb'],
        type_emb=params['type_emb'],
        emb_ln_g=params['emb_ln_g'], emb_ln_b=params['emb_ln_b'],
        wslab=jnp.stack([mat_slab(lp) for lp in layers]).astype(MXU_DTYPE),  # [L,H,192] bf16
        w2=jnp.stack([lp['w2'] for lp in layers]).astype(MXU_DTYPE),         # [L,INTER,H] bf16
        vslab=jnp.stack([vec_slab(lp) for lp in layers]),                    # [L,8,128] f32
        wheads=wheads.astype(MXU_DTYPE),                                     # [2H,128] bf16
        bheads=bheads,                                                       # [1,128] f32
    )


if __name__ == "__main__":
    key = jax.random.PRNGKey(0)
    kparam, kid = jax.random.split(key)
    params = init_params(kparam)
    kernel_params = pack_params(params)

    input_ids = jax.random.randint(kid, (B, S), 3, VOCAB, dtype=jnp.int32)
    attention_mask = jnp.ones((B, S), jnp.int32)
    token_type_ids = jnp.zeros((B, S), jnp.int32)
    special_tokens_mask = (jnp.zeros((B, S), jnp.int32)
                           .at[:, 0].set(1).at[:, -1].set(1))

    lh, lt, lseg = forward(kernel_params, input_ids, attention_mask,
                           token_type_ids, special_tokens_mask)
    jax.block_until_ready((lh, lt, lseg))

    rh, rt, rseg = reference_forward(params, input_ids, attention_mask,
                                     token_type_ids, special_tokens_mask)
    # Tolerance covers bf16 MXU operands + pl.reciprocal(approx=True) vs f32 reference.
    for a, r in ((lh, rh), (lt, rt), (lseg, rseg)):
        np.testing.assert_allclose(np.asarray(a), np.asarray(r),
                                   rtol=2e-2, atol=2e-2)

    print("KERNEL_OK")
</pallas_src>

<mosaic_0001>
module attributes {stable_mosaic.version = 11 : i64} {
  func.func @fused_forward_kernel(%arg0: i32, %arg1: i32, %arg2: memref<1x8x32xf32, #tpu.memory_space<vmem>>, %arg3: memref<1x8x32xf32, #tpu.memory_space<vmem>>, %arg4: memref<1x8x32xf32, #tpu.memory_space<vmem>>, %arg5: memref<1x32xf32, #tpu.memory_space<vmem>>, %arg6: memref<1x32xf32, #tpu.memory_space<vmem>>, %arg7: memref<1x1x8xf32, #tpu.memory_space<vmem>>, %arg8: memref<1x32x192xbf16, #tpu.memory_space<vmem>>, %arg9: memref<1x64x32xbf16, #tpu.memory_space<vmem>>, %arg10: memref<1x8x128xf32, #tpu.memory_space<vmem>>, %arg11: memref<64x128xbf16, #tpu.memory_space<vmem>>, %arg12: memref<1x128xf32, #tpu.memory_space<vmem>>, %arg13: memref<1x8x1xi32, #tpu.memory_space<vmem>>, %arg14: memref<1x8x1xi32, #tpu.memory_space<vmem>>, %arg15: memref<1x8x128xf32, #tpu.memory_space<vmem>>, %arg16: memref<8x32xf32, #tpu.memory_space<vmem>>) attributes {dimension_semantics = [#tpu.dimension_semantics<parallel>, #tpu.dimension_semantics<arbitrary>], iteration_bounds = array<i64: 2, 2>, scalar_prefetch = 0 : i64, scratch_operands = 1 : i64, tpu.core_type = #tpu.core_type<tc>, window_params = [{transform_indices = @transform_0, window_bounds = array<i64: 1, 8, 32>}, {transform_indices = @transform_1, window_bounds = array<i64: 1, 8, 32>}, {transform_indices = @transform_2, window_bounds = array<i64: 1, 8, 32>}, {pipeline_mode = #tpu.pipeline_mode<synchronous>, transform_indices = @transform_3, window_bounds = array<i64: 1, 32>}, {pipeline_mode = #tpu.pipeline_mode<synchronous>, transform_indices = @transform_4, window_bounds = array<i64: 1, 32>}, {transform_indices = @transform_5, window_bounds = array<i64: 1, 1, 8>}, {transform_indices = @transform_6, window_bounds = array<i64: 1, 32, 192>}, {transform_indices = @transform_7, window_bounds = array<i64: 1, 64, 32>}, {transform_indices = @transform_8, window_bounds = array<i64: 1, 8, 128>}, {pipeline_mode = #tpu.pipeline_mode<synchronous>, transform_indices = @transform_9, window_bounds = array<i64: 64, 128>}, {pipeline_mode = #tpu.pipeline_mode<synchronous>, transform_indices = @transform_10, window_bounds = array<i64: 1, 128>}, {transform_indices = @transform_11, window_bounds = array<i64: 1, 8, 1>}, {transform_indices = @transform_12, window_bounds = array<i64: 1, 8, 1>}, {transform_indices = @transform_13, window_bounds = array<i64: 1, 8, 128>}]} {
    %c0_i32 = arith.constant 0 : i32
    %0 = arith.cmpi eq, %arg1, %c0_i32 : i32
    %1 = arith.extui %0 : i1 to i32
    %c0_i32_0 = arith.constant 0 : i32
    %2 = arith.cmpi ne, %1, %c0_i32_0 : i32
    scf.if %2 {
      %c0_39 = arith.constant 0 : index
      %c0_40 = arith.constant 0 : index
      %c0_41 = arith.constant 0 : index
      %130 = vector.load %arg2[%c0_39, %c0_40, %c0_41] : memref<1x8x32xf32, #tpu.memory_space<vmem>>, vector<1x8x32xf32>
      %131 = vector.shape_cast %130 : vector<1x8x32xf32> to vector<8x32xf32>
      %c0_42 = arith.constant 0 : index
      %c0_43 = arith.constant 0 : index
      %c0_44 = arith.constant 0 : index
      %132 = vector.load %arg3[%c0_42, %c0_43, %c0_44] : memref<1x8x32xf32, #tpu.memory_space<vmem>>, vector<1x8x32xf32>
      %133 = vector.shape_cast %132 : vector<1x8x32xf32> to vector<8x32xf32>
      %134 = arith.addf %131, %133 : vector<8x32xf32>
      %c0_45 = arith.constant 0 : index
      %c0_46 = arith.constant 0 : index
      %c0_47 = arith.constant 0 : index
      %135 = vector.load %arg4[%c0_45, %c0_46, %c0_47] : memref<1x8x32xf32, #tpu.memory_space<vmem>>, vector<1x8x32xf32>
      %136 = vector.shape_cast %135 : vector<1x8x32xf32> to vector<8x32xf32>
      %137 = arith.addf %134, %136 : vector<8x32xf32>
      %c0_48 = arith.constant 0 : index
      %c0_49 = arith.constant 0 : index
      %138 = vector.load %arg5[%c0_48, %c0_49] : memref<1x32xf32, #tpu.memory_space<vmem>>, vector<1x32xf32>
      %c0_50 = arith.constant 0 : index
      %c0_51 = arith.constant 0 : index
      %139 = vector.load %arg6[%c0_50, %c0_51] : memref<1x32xf32, #tpu.memory_space<vmem>>, vector<1x32xf32>
      %cst_52 = arith.constant dense<0.000000e+00> : vector<8xf32>
      %140 = vector.multi_reduction <add>, %137, %cst_52 [1] : vector<8x32xf32> to vector<8xf32>
      %141 = vector.shape_cast %140 : vector<8xf32> to vector<8x1xf32>
      %cst_53 = arith.constant 3.200000e+01 : f32
      %142 = vector.broadcast %cst_53 : f32 to vector<8x1xf32>
      %143 = arith.divf %141, %142 : vector<8x1xf32>
      %144 = vector.broadcast %143 : vector<8x1xf32> to vector<8x32xf32>
      %145 = arith.subf %137, %144 : vector<8x32xf32>
      %146 = arith.mulf %145, %145 : vector<8x32xf32>
      %cst_54 = arith.constant dense<0.000000e+00> : vector<8xf32>
      %147 = vector.multi_reduction <add>, %146, %cst_54 [1] : vector<8x32xf32> to vector<8xf32>
      %148 = vector.shape_cast %147 : vector<8xf32> to vector<8x1xf32>
      %cst_55 = arith.constant 3.200000e+01 : f32
      %149 = vector.broadcast %cst_55 : f32 to vector<8x1xf32>
      %150 = arith.divf %148, %149 : vector<8x1xf32>
      %151 = vector.broadcast %143 : vector<8x1xf32> to vector<8x32xf32>
      %152 = arith.subf %137, %151 : vector<8x32xf32>
      %cst_56 = arith.constant 9.99999974E-6 : f32
      %153 = vector.broadcast %cst_56 : f32 to vector<8x1xf32>
      %154 = arith.addf %150, %153 : vector<8x1xf32>
      %155 = math.rsqrt %154 : vector<8x1xf32>
      %156 = vector.broadcast %155 : vector<8x1xf32> to vector<8x32xf32>
      %157 = arith.mulf %152, %156 : vector<8x32xf32>
      %158 = vector.broadcast %138 : vector<1x32xf32> to vector<8x32xf32>
      %159 = arith.mulf %157, %158 : vector<8x32xf32>
      %160 = vector.broadcast %139 : vector<1x32xf32> to vector<8x32xf32>
      %161 = arith.addf %159, %160 : vector<8x32xf32>
      %c0_57 = arith.constant 0 : index
      %c0_58 = arith.constant 0 : index
      %162 = vector.load %arg16[%c0_57, %c0_58] : memref<8x32xf32, #tpu.memory_space<vmem>>, vector<8x32xf32>
      tpu.vector_store %arg16[%c0_57, %c0_58], %161 {strides = array<i32>} : memref<8x32xf32, #tpu.memory_space<vmem>>, vector<8x32xf32>,
    } else {
    }
    %c0 = arith.constant 0 : index
    %c0_1 = arith.constant 0 : index
    %c0_2 = arith.constant 0 : index
    %3 = vector.load %arg8[%c0, %c0_1, %c0_2] : memref<1x32x192xbf16, #tpu.memory_space<vmem>>, vector<1x32x192xbf16>
    %4 = vector.shape_cast %3 : vector<1x32x192xbf16> to vector<32x192xbf16>
    %5 = vector.extract_strided_slice %4 {offsets = [0, 0], sizes = [32, 96], strides = [1, 1]} : vector<32x192xbf16> to vector<32x96xbf16>
    %6 = vector.extract_strided_slice %4 {offsets = [0, 96], sizes = [32, 32], strides = [1, 1]} : vector<32x192xbf16> to vector<32x32xbf16>
    %7 = vector.extract_strided_slice %4 {offsets = [0, 128], sizes = [32, 64], strides = [1, 1]} : vector<32x192xbf16> to vector<32x64xbf16>
    %c0_3 = arith.constant 0 : index
    %c0_4 = arith.constant 0 : index
    %c0_5 = arith.constant 0 : index
    %8 = vector.load %arg9[%c0_3, %c0_4, %c0_5] : memref<1x64x32xbf16, #tpu.memory_space<vmem>>, vector<1x64x32xbf16>
    %9 = vector.shape_cast %8 : vector<1x64x32xbf16> to vector<64x32xbf16>
    %c0_6 = arith.constant 0 : index
    %c0_7 = arith.constant 0 : index
    %c0_8 = arith.constant 0 : index
    %10 = vector.load %arg10[%c0_6, %c0_7, %c0_8] : memref<1x8x128xf32, #tpu.memory_space<vmem>>, vector<1x8x128xf32>
    %11 = vector.shape_cast %10 : vector<1x8x128xf32> to vector<8x128xf32>
    %12 = vector.extract_strided_slice %11 {offsets = [0, 0], sizes = [1, 96], strides = [1, 1]} : vector<8x128xf32> to vector<1x96xf32>
    %13 = vector.extract_strided_slice %11 {offsets = [1, 0], sizes = [1, 32], strides = [1, 1]} : vector<8x128xf32> to vector<1x32xf32>
    %14 = vector.extract_strided_slice %11 {offsets = [2, 0], sizes = [1, 64], strides = [1, 1]} : vector<8x128xf32> to vector<1x64xf32>
    %15 = vector.extract_strided_slice %11 {offsets = [3, 0], sizes = [1, 32], strides = [1, 1]} : vector<8x128xf32> to vector<1x32xf32>
    %16 = vector.extract_strided_slice %11 {offsets = [4, 0], sizes = [1, 32], strides = [1, 1]} : vector<8x128xf32> to vector<1x32xf32>
    %17 = vector.extract_strided_slice %11 {offsets = [5, 0], sizes = [1, 32], strides = [1, 1]} : vector<8x128xf32> to vector<1x32xf32>
    %18 = vector.extract_strided_slice %11 {offsets = [6, 0], sizes = [1, 32], strides = [1, 1]} : vector<8x128xf32> to vector<1x32xf32>
    %19 = vector.extract_strided_slice %11 {offsets = [7, 0], sizes = [1, 32], strides = [1, 1]} : vector<8x128xf32> to vector<1x32xf32>
    %c0_9 = arith.constant 0 : index
    %c0_10 = arith.constant 0 : index
    %20 = vector.load %arg16[%c0_9, %c0_10] : memref<8x32xf32, #tpu.memory_space<vmem>>, vector<8x32xf32>
    %21 = arith.truncf %20 : vector<8x32xf32> to vector<8x32xbf16>
    %cst = arith.constant dense<0.000000e+00> : vector<8x96xf32>
    %22 = tpu.matmul %21, %5, %cst {dimension_numbers = #tpu.dot_dimension_numbers<[1], [0], [0], [1], [0, 0, 1, 1], [], []>} : vector<8x32xbf16>, vector<32x96xbf16>, vector<8x96xf32> -> vector<8x96xf32>
    %23 = vector.broadcast %12 : vector<1x96xf32> to vector<8x96xf32>
    %24 = arith.addf %22, %23 : vector<8x96xf32>
    %25 = vector.shape_cast %24 : vector<8x96xf32> to vector<8x6x16xf32>
    %26 = tpu.transpose %25, [1, 0, 2] : vector<8x6x16xf32> -> vector<6x8x16xf32>
    %27 = vector.extract_strided_slice %26 {offsets = [0, 0, 0], sizes = [2, 8, 16], strides = [1, 1, 1]} : vector<6x8x16xf32> to vector<2x8x16xf32>
    %28 = arith.truncf %27 : vector<2x8x16xf32> to vector<2x8x16xbf16>
    %29 = vector.extract_strided_slice %26 {offsets = [2, 0, 0], sizes = [2, 8, 16], strides = [1, 1, 1]} : vector<6x8x16xf32> to vector<2x8x16xf32>
    %30 = arith.truncf %29 : vector<2x8x16xf32> to vector<2x8x16xbf16>
    %31 = vector.extract_strided_slice %26 {offsets = [4, 0, 0], sizes = [2, 8, 16], strides = [1, 1, 1]} : vector<6x8x16xf32> to vector<2x8x16xf32>
    %32 = arith.truncf %31 : vector<2x8x16xf32> to vector<2x8x16xbf16>
    "tpu.trace_start"() <{level = 10 : i32, message = "hqd,hkd->hqk"}> : () -> ()
    %cst_11 = arith.constant dense<0.000000e+00> : vector<2x8x8xf32>
    %33 = tpu.matmul %28, %30, %cst_11 {dimension_numbers = #tpu.dot_dimension_numbers<[2], [2], [1], [1], [0, 0, 0, 1, 1, 1], [0], [0]>} : vector<2x8x16xbf16>, vector<2x8x16xbf16>, vector<2x8x8xf32> -> vector<2x8x8xf32>
    "tpu.trace_stop"() : () -> ()
    %cst_12 = arith.constant 2.500000e-01 : f32
    %34 = vector.broadcast %cst_12 : f32 to vector<2x8x8xf32>
    %35 = arith.mulf %33, %34 : vector<2x8x8xf32>
    %c0_13 = arith.constant 0 : index
    %c0_14 = arith.constant 0 : index
    %c0_15 = arith.constant 0 : index
    %36 = vector.load %arg7[%c0_13, %c0_14, %c0_15] : memref<1x1x8xf32, #tpu.memory_space<vmem>>, vector<1x1x8xf32>
    %37 = vector.shape_cast %36 : vector<1x1x8xf32> to vector<1x8xf32>
    %38 = vector.shape_cast %37 : vector<1x8xf32> to vector<1x1x8xf32>
    %39 = vector.broadcast %38 : vector<1x1x8xf32> to vector<2x8x8xf32>
    %40 = arith.addf %35, %39 : vector<2x8x8xf32>
    %cst_16 = arith.constant dense<0xFF800000> : vector<2x8xf32>
    %41 = vector.multi_reduction <maximumf>, %40, %cst_16 [2] : vector<2x8x8xf32> to vector<2x8xf32>
    %42 = vector.shape_cast %41 : vector<2x8xf32> to vector<2x8x1xf32>
    %43 = vector.broadcast %42 : vector<2x8x1xf32> to vector<2x8x8xf32>
    %44 = arith.subf %40, %43 : vector<2x8x8xf32>
    %45 = math.exp %44 : vector<2x8x8xf32>
    %cst_17 = arith.constant dense<0.000000e+00> : vector<2x8xf32>
    %46 = vector.multi_reduction <add>, %45, %cst_17 [2] : vector<2x8x8xf32> to vector<2x8xf32>
    %47 = vector.shape_cast %46 : vector<2x8xf32> to vector<2x8x1xf32>
    %48 = tpu.reciprocal %47 {approx = true} : vector<2x8x1xf32> -> vector<2x8x1xf32>
    %49 = vector.broadcast %48 : vector<2x8x1xf32> to vector<2x8x8xf32>
    %50 = arith.mulf %45, %49 : vector<2x8x8xf32>
    %51 = arith.truncf %50 : vector<2x8x8xf32> to vector<2x8x8xbf16>
    "tpu.trace_start"() <{level = 10 : i32, message = "hqk,hkd->hqd"}> : () -> ()
    %cst_18 = arith.constant dense<0.000000e+00> : vector<2x8x16xf32>
    %52 = tpu.matmul %51, %32, %cst_18 {dimension_numbers = #tpu.dot_dimension_numbers<[2], [1], [1], [2], [0, 0, 0, 1, 1, 2], [0], [0]>} : vector<2x8x8xbf16>, vector<2x8x16xbf16>, vector<2x8x16xf32> -> vector<2x8x16xf32>
    "tpu.trace_stop"() : () -> ()
    %53 = tpu.transpose %52, [1, 0, 2] : vector<2x8x16xf32> -> vector<8x2x16xf32>
    %54 = vector.shape_cast %53 : vector<8x2x16xf32> to vector<8x32xf32>
    %55 = arith.truncf %54 : vector<8x32xf32> to vector<8x32xbf16>
    %cst_19 = arith.constant dense<0.000000e+00> : vector<8x32xf32>
    %56 = tpu.matmul %55, %6, %cst_19 {dimension_numbers = #tpu.dot_dimension_numbers<[1], [0], [0], [1], [0, 0, 1, 1], [], []>} : vector<8x32xbf16>, vector<32x32xbf16>, vector<8x32xf32> -> vector<8x32xf32>
    %57 = vector.broadcast %13 : vector<1x32xf32> to vector<8x32xf32>
    %58 = arith.addf %56, %57 : vector<8x32xf32>
    %59 = arith.addf %20, %58 : vector<8x32xf32>
    %cst_20 = arith.constant dense<0.000000e+00> : vector<8xf32>
    %60 = vector.multi_reduction <add>, %59, %cst_20 [1] : vector<8x32xf32> to vector<8xf32>
    %61 = vector.shape_cast %60 : vector<8xf32> to vector<8x1xf32>
    %cst_21 = arith.constant 3.200000e+01 : f32
    %62 = vector.broadcast %cst_21 : f32 to vector<8x1xf32>
    %63 = arith.divf %61, %62 : vector<8x1xf32>
    %64 = vector.broadcast %63 : vector<8x1xf32> to vector<8x32xf32>
    %65 = arith.subf %59, %64 : vector<8x32xf32>
    %66 = arith.mulf %65, %65 : vector<8x32xf32>
    %cst_22 = arith.constant dense<0.000000e+00> : vector<8xf32>
    %67 = vector.multi_reduction <add>, %66, %cst_22 [1] : vector<8x32xf32> to vector<8xf32>
    %68 = vector.shape_cast %67 : vector<8xf32> to vector<8x1xf32>
    %cst_23 = arith.constant 3.200000e+01 : f32
    %69 = vector.broadcast %cst_23 : f32 to vector<8x1xf32>
    %70 = arith.divf %68, %69 : vector<8x1xf32>
    %71 = vector.broadcast %63 : vector<8x1xf32> to vector<8x32xf32>
    %72 = arith.subf %59, %71 : vector<8x32xf32>
    %cst_24 = arith.constant 9.99999974E-6 : f32
    %73 = vector.broadcast %cst_24 : f32 to vector<8x1xf32>
    %74 = arith.addf %70, %73 : vector<8x1xf32>
    %75 = math.rsqrt %74 : vector<8x1xf32>
    %76 = vector.broadcast %75 : vector<8x1xf32> to vector<8x32xf32>
    %77 = arith.mulf %72, %76 : vector<8x32xf32>
    %78 = vector.broadcast %16 : vector<1x32xf32> to vector<8x32xf32>
    %79 = arith.mulf %77, %78 : vector<8x32xf32>
    %80 = vector.broadcast %17 : vector<1x32xf32> to vector<8x32xf32>
    %81 = arith.addf %79, %80 : vector<8x32xf32>
    %82 = arith.truncf %81 : vector<8x32xf32> to vector<8x32xbf16>
    %cst_25 = arith.constant dense<0.000000e+00> : vector<8x64xf32>
    %83 = tpu.matmul %82, %7, %cst_25 {dimension_numbers = #tpu.dot_dimension_numbers<[1], [0], [0], [1], [0, 0, 1, 1], [], []>} : vector<8x32xbf16>, vector<32x64xbf16>, vector<8x64xf32> -> vector<8x64xf32>
    %84 = vector.broadcast %14 : vector<1x64xf32> to vector<8x64xf32>
    %85 = arith.addf %83, %84 : vector<8x64xf32>
    %cst_26 = arith.constant 5.000000e-01 : f32
    %86 = vector.broadcast %cst_26 : f32 to vector<8x64xf32>
    %87 = arith.mulf %86, %85 : vector<8x64xf32>
    %cst_27 = arith.constant 4.471500e-02 : f32
    %88 = vector.broadcast %cst_27 : f32 to vector<8x64xf32>
    %89 = arith.mulf %88, %85 : vector<8x64xf32>
    %90 = arith.mulf %89, %85 : vector<8x64xf32>
    %91 = arith.mulf %90, %85 : vector<8x64xf32>
    %92 = arith.addf %85, %91 : vector<8x64xf32>
    %cst_28 = arith.constant 0.797884583 : f32
    %93 = vector.broadcast %cst_28 : f32 to vector<8x64xf32>
    %94 = arith.mulf %93, %92 : vector<8x64xf32>
    %95 = math.tanh %94 : vector<8x64xf32>
    %cst_29 = arith.constant 1.000000e+00 : f32
    %96 = vector.broadcast %cst_29 : f32 to vector<8x64xf32>
    %97 = arith.addf %96, %95 : vector<8x64xf32>
    %98 = arith.mulf %87, %97 : vector<8x64xf32>
    %99 = arith.truncf %98 : vector<8x64xf32> to vector<8x64xbf16>
    %cst_30 = arith.constant dense<0.000000e+00> : vector<8x32xf32>
    %100 = tpu.matmul %99, %9, %cst_30 {dimension_numbers = #tpu.dot_dimension_numbers<[1], [0], [0], [1], [0, 0, 1, 1], [], []>} : vector<8x64xbf16>, vector<64x32xbf16>, vector<8x32xf32> -> vector<8x32xf32>
    %101 = arith.addf %81, %100 : vector<8x32xf32>
    %102 = vector.broadcast %15 : vector<1x32xf32> to vector<8x32xf32>
    %103 = arith.addf %101, %102 : vector<8x32xf32>
    %cst_31 = arith.constant dense<0.000000e+00> : vector<8xf32>
    %104 = vector.multi_reduction <add>, %103, %cst_31 [1] : vector<8x32xf32> to vector<8xf32>
    %105 = vector.shape_cast %104 : vector<8xf32> to vector<8x1xf32>
    %cst_32 = arith.constant 3.200000e+01 : f32
    %106 = vector.broadcast %cst_32 : f32 to vector<8x1xf32>
    %107 = arith.divf %105, %106 : vector<8x1xf32>
    %108 = vector.broadcast %107 : vector<8x1xf32> to vector<8x32xf32>
    %109 = arith.subf %103, %108 : vector<8x32xf32>
    %110 = arith.mulf %109, %109 : vector<8x32xf32>
    %cst_33 = arith.constant dense<0.000000e+00> : vector<8xf32>
    %111 = vector.multi_reduction <add>, %110, %cst_33 [1] : vector<8x32xf32> to vector<8xf32>
    %112 = vector.shape_cast %111 : vector<8xf32> to vector<8x1xf32>
    %cst_34 = arith.constant 3.200000e+01 : f32
    %113 = vector.broadcast %cst_34 : f32 to vector<8x1xf32>
    %114 = arith.divf %112, %113 : vector<8x1xf32>
    %115 = vector.broadcast %107 : vector<8x1xf32> to vector<8x32xf32>
    %116 = arith.subf %103, %115 : vector<8x32xf32>
    %cst_35 = arith.constant 9.99999974E-6 : f32
    %117 = vector.broadcast %cst_35 : f32 to vector<8x1xf32>
    %118 = arith.addf %114, %117 : vector<8x1xf32>
    %119 = math.rsqrt %118 : vector<8x1xf32>
    %120 = vector.broadcast %119 : vector<8x1xf32> to vector<8x32xf32>
    %121 = arith.mulf %116, %120 : vector<8x32xf32>
    %122 = vector.broadcast %18 : vector<1x32xf32> to vector<8x32xf32>
    %123 = arith.mulf %121, %122 : vector<8x32xf32>
    %124 = vector.broadcast %19 : vector<1x32xf32> to vector<8x32xf32>
    %125 = arith.addf %123, %124 : vector<8x32xf32>
    %c0_36 = arith.constant 0 : index
    %c0_37 = arith.constant 0 : index
    %126 = vector.load %arg16[%c0_36, %c0_37] : memref<8x32xf32, #tpu.memory_space<vmem>>, vector<8x32xf32>
    tpu.vector_store %arg16[%c0_36, %c0_37], %125 {strides = array<i32>} : memref<8x32xf32, #tpu.memory_space<vmem>>, vector<8x32xf32>,
    %c1_i32 = arith.constant 1 : i32
    %127 = arith.cmpi eq, %arg1, %c1_i32 : i32
    %128 = arith.extui %127 : i1 to i32
    %c0_i32_38 = arith.constant 0 : i32
    %129 = arith.cmpi ne, %128, %c0_i32_38 : i32
    scf.if %129 {
      %c0_39 = arith.constant 0 : index
      %c0_40 = arith.constant 0 : index
      %130 = vector.load %arg11[%c0_39, %c0_40] : memref<64x128xbf16, #tpu.memory_space<vmem>>, vector<32x128xbf16>
      %131 = arith.truncf %125 : vector<8x32xf32> to vector<8x32xbf16>
      %cst_41 = arith.constant dense<0.000000e+00> : vector<8x128xf32>
      %132 = tpu.matmul %131, %130, %cst_41 {dimension_numbers = #tpu.dot_dimension_numbers<[1], [0], [0], [1], [0, 0, 1, 1], [], []>} : vector<8x32xbf16>, vector<32x128xbf16>, vector<8x128xf32> -> vector<8x128xf32>
      %c32 = arith.constant 32 : index
      %c0_42 = arith.constant 0 : index
      %133 = vector.load %arg11[%c32, %c0_42] : memref<64x128xbf16, #tpu.memory_space<vmem>>, vector<32x128xbf16>
      %134 = arith.truncf %20 : vector<8x32xf32> to vector<8x32xbf16>
      %cst_43 = arith.constant dense<0.000000e+00> : vector<8x128xf32>
      %135 = tpu.matmul %134, %133, %cst_43 {dimension_numbers = #tpu.dot_dimension_numbers<[1], [0], [0], [1], [0, 0, 1, 1], [], []>} : vector<8x32xbf16>, vector<32x128xbf16>, vector<8x128xf32> -> vector<8x128xf32>
      %136 = arith.addf %132, %135 : vector<8x128xf32>
      %c0_44 = arith.constant 0 : index
      %c0_45 = arith.constant 0 : index
      %137 = vector.load %arg12[%c0_44, %c0_45] : memref<1x128xf32, #tpu.memory_space<vmem>>, vector<1x128xf32>
      %138 = vector.broadcast %137 : vector<1x128xf32> to vector<8x128xf32>
      %139 = arith.addf %136, %138 : vector<8x128xf32>
      %140 = tpu.iota {dimensions = array<i32: 1>} : vector<8x128xi32>
      %c0_i32_46 = arith.constant 0 : i32
      %141 = vector.broadcast %c0_i32_46 : i32 to vector<8x128xi32>
      %142 = arith.cmpi eq, %140, %141 : vector<8x128xi32>
      %c0_47 = arith.constant 0 : index
      %c0_48 = arith.constant 0 : index
      %c0_49 = arith.constant 0 : index
      %143 = vector.load %arg13[%c0_47, %c0_48, %c0_49] : memref<1x8x1xi32, #tpu.memory_space<vmem>>, vector<1x8x1xi32>
      %144 = vector.shape_cast %143 : vector<1x8x1xi32> to vector<8x1xi32>
      %c1_i32_50 = arith.constant 1 : i32
      %145 = vector.broadcast %c1_i32_50 : i32 to vector<8x128xi32>
      %146 = arith.cmpi eq, %140, %145 : vector<8x128xi32>
      %c0_51 = arith.constant 0 : index
      %c0_52 = arith.constant 0 : index
      %c0_53 = arith.constant 0 : index
      %147 = vector.load %arg14[%c0_51, %c0_52, %c0_53] : memref<1x8x1xi32, #tpu.memory_space<vmem>>, vector<1x8x1xi32>
      %148 = vector.shape_cast %147 : vector<1x8x1xi32> to vector<8x1xi32>
      %c0_i32_54 = arith.constant 0 : i32
      %149 = vector.shape_cast %148 : vector<8x1xi32> to vector<8x1xi32>
      %150 = vector.broadcast %149 : vector<8x1xi32> to vector<8x128xi32>
      %151 = vector.broadcast %c0_i32_54 : i32 to vector<8x128xi32>
      %152 = arith.select %146, %150, %151 : vector<8x128xi1>, vector<8x128xi32>
      %153 = vector.shape_cast %144 : vector<8x1xi32> to vector<8x1xi32>
      %154 = vector.broadcast %153 : vector<8x1xi32> to vector<8x128xi32>
      %155 = arith.select %142, %154, %152 : vector<8x128xi1>, vector<8x128xi32>
      %c0_i32_55 = arith.constant 0 : i32
      %156 = vector.broadcast %c0_i32_55 : i32 to vector<8x128xi32>
      %157 = arith.cmpi eq, %155, %156 : vector<8x128xi32>
      %cst_56 = arith.constant 0xFF800000 : f32
      %158 = vector.broadcast %cst_56 : f32 to vector<8x128xf32>
      %159 = arith.select %157, %139, %158 : vector<8x128xi1>, vector<8x128xf32>
      %c0_57 = arith.constant 0 : index
      %c0_58 = arith.constant 0 : index
      %c0_59 = arith.constant 0 : index
      %160 = vector.load %arg15[%c0_57, %c0_58, %c0_59] : memref<1x8x128xf32, #tpu.memory_space<vmem>>, vector<1x8x128xf32>
      %161 = vector.shape_cast %160 : vector<1x8x128xf32> to vector<8x128xf32>
      %162 = vector.shape_cast %159 : vector<8x128xf32> to vector<1x8x128xf32>
      tpu.vector_store %arg15[%c0_57, %c0_58, %c0_59], %162 {strides = array<i32>} : memref<1x8x128xf32, #tpu.memory_space<vmem>>, vector<1x8x128xf32>,
    } else {
    }
    return
  }
  func.func @transform_0(%arg0: i32, %arg1: i32) -> (i32, i32, i32) {
    %c0_i32 = arith.constant 0 : i32
    %c0_i32_0 = arith.constant 0 : i32
    %c0_i32_1 = arith.constant 0 : i32
    return %arg0, %c0_i32, %c0_i32_0 : i32, i32, i32
  }
  func.func @transform_1(%arg0: i32, %arg1: i32) -> (i32, i32, i32) {
    %c0_i32 = arith.constant 0 : i32
    %c0_i32_0 = arith.constant 0 : i32
    %c0_i32_1 = arith.constant 0 : i32
    return %arg0, %c0_i32, %c0_i32_0 : i32, i32, i32
  }
  func.func @transform_2(%arg0: i32, %arg1: i32) -> (i32, i32, i32) {
    %c0_i32 = arith.constant 0 : i32
    %c0_i32_0 = arith.constant 0 : i32
    %c0_i32_1 = arith.constant 0 : i32
    return %arg0, %c0_i32, %c0_i32_0 : i32, i32, i32
  }
  func.func @transform_3(%arg0: i32, %arg1: i32) -> (i32, i32) {
    %c0_i32 = arith.constant 0 : i32
    %c0_i32_0 = arith.constant 0 : i32
    %c0_i32_1 = arith.constant 0 : i32
    return %c0_i32, %c0_i32_0 : i32, i32
  }
  func.func @transform_4(%arg0: i32, %arg1: i32) -> (i32, i32) {
    %c0_i32 = arith.constant 0 : i32
    %c0_i32_0 = arith.constant 0 : i32
    %c0_i32_1 = arith.constant 0 : i32
    return %c0_i32, %c0_i32_0 : i32, i32
  }
  func.func @transform_5(%arg0: i32, %arg1: i32) -> (i32, i32, i32) {
    %c0_i32 = arith.constant 0 : i32
    %c0_i32_0 = arith.constant 0 : i32
    %c0_i32_1 = arith.constant 0 : i32
    return %arg0, %c0_i32, %c0_i32_0 : i32, i32, i32
  }
  func.func @transform_6(%arg0: i32, %arg1: i32) -> (i32, i32, i32) {
    %c0_i32 = arith.constant 0 : i32
    %c0_i32_0 = arith.constant 0 : i32
    %c0_i32_1 = arith.constant 0 : i32
    return %arg1, %c0_i32, %c0_i32_0 : i32, i32, i32
  }
  func.func @transform_7(%arg0: i32, %arg1: i32) -> (i32, i32, i32) {
    %c0_i32 = arith.constant 0 : i32
    %c0_i32_0 = arith.constant 0 : i32
    %c0_i32_1 = arith.constant 0 : i32
    return %arg1, %c0_i32, %c0_i32_0 : i32, i32, i32
  }
  func.func @transform_8(%arg0: i32, %arg1: i32) -> (i32, i32, i32) {
    %c0_i32 = arith.constant 0 : i32
    %c0_i32_0 = arith.constant 0 : i32
    %c0_i32_1 = arith.constant 0 : i32
    return %arg1, %c0_i32, %c0_i32_0 : i32, i32, i32
  }
  func.func @transform_9(%arg0: i32, %arg1: i32) -> (i32, i32) {
    %c0_i32 = arith.constant 0 : i32
    %c0_i32_0 = arith.constant 0 : i32
    %c0_i32_1 = arith.constant 0 : i32
    return %c0_i32, %c0_i32_0 : i32, i32
  }
  func.func @transform_10(%arg0: i32, %arg1: i32) -> (i32, i32) {
    %c0_i32 = arith.constant 0 : i32
    %c0_i32_0 = arith.constant 0 : i32
    %c0_i32_1 = arith.constant 0 : i32
    return %c0_i32, %c0_i32_0 : i32, i32
  }
  func.func @transform_11(%arg0: i32, %arg1: i32) -> (i32, i32, i32) {
    %c0_i32 = arith.constant 0 : i32
    %c0_i32_0 = arith.constant 0 : i32
    %c0_i32_1 = arith.constant 0 : i32
    return %arg0, %c0_i32, %c0_i32_0 : i32, i32, i32
  }
  func.func @transform_12(%arg0: i32, %arg1: i32) -> (i32, i32, i32) {
    %c0_i32 = arith.constant 0 : i32
    %c0_i32_0 = arith.constant 0 : i32
    %c0_i32_1 = arith.constant 0 : i32
    return %arg0, %c0_i32, %c0_i32_0 : i32, i32, i32
  }
  func.func @transform_13(%arg0: i32, %arg1: i32) -> (i32, i32, i32) {
    %c0_i32 = arith.constant 0 : i32
    %c0_i32_0 = arith.constant 0 : i32
    %c0_i32_1 = arith.constant 0 : i32
    return %arg0, %c0_i32, %c0_i32_0 : i32, i32, i32
  }
}

</mosaic_0001>

<llo_original>
// kernel: forward.1
$region0: #{forward.1}
  #allocation0 [shape = 'u32[]', space=smem, size = 0x4, offset = 0x4, fixed_abs, tag = 'smem constant byte address 0x4 - core index']
  #allocation1 [shape = 'u32[144,128]{1,0:T(1,128)}', space=vmem, size = 0x12000, scoped, tag = 'internal scratch']
  #allocation2 [shape = 'f32[8,32]{1,0:T(8,128)}', space=vmem, size = 0x1000, scoped, tag = 'scratch operand']
  %s0 = inlined_call_operand.vmem [shape: f32[2,8,32], index: 0, kind: input, shape index: {}]
  %s1 = inlined_call_operand.vmem [shape: f32[2,8,32], index: 1, kind: input, shape index: {}]
  %s2 = inlined_call_operand.vmem [shape: f32[2,8,32], index: 2, kind: input, shape index: {}]
  %s3 = inlined_call_operand.vmem [shape: f32[1,32], index: 3, kind: input, shape index: {}]
  %s4 = inlined_call_operand.vmem [shape: f32[1,32], index: 4, kind: input, shape index: {}]
  %s5 = inlined_call_operand.vmem [shape: f32[2,1,8], index: 5, kind: input, shape index: {}]
  %s6 = inlined_call_operand.vmem [shape: bf16[2,32,192], index: 6, kind: input, shape index: {}]
  %s7 = inlined_call_operand.vmem [shape: bf16[2,64,32], index: 7, kind: input, shape index: {}]
  %s8 = inlined_call_operand.vmem [shape: f32[2,8,128], index: 8, kind: input, shape index: {}]
  %s9 = inlined_call_operand.vmem [shape: bf16[64,128], index: 9, kind: input, shape index: {}]
  %s10 = inlined_call_operand.vmem [shape: f32[1,128], index: 10, kind: input, shape index: {}]
  %s11 = inlined_call_operand.vmem [shape: s32[2,8,1], index: 11, kind: input, shape index: {}]
  %s12 = inlined_call_operand.vmem [shape: s32[2,8,1], index: 12, kind: input, shape index: {}]
  %s13 = inlined_call_operand.vmem [shape: f32[2,8,128], index: 13, kind: output, shape index: {}]
  %s14 = sld [smem:[#allocation0]]
  $region93: #{forward.1} parent=0
    _
  %s16 = ssub.s32 1, %s14
  %s17 = scalar_select 0, %s16, %s14
  loop: start=0, step=1, limit=6
  $region2: #{forward.1} parent=0 // loop_pre_header
    _
  $region3: #{forward.1} parent=0 // loop_header
    %s19 = sphi 0, %s23
    %p20 = scmp.ge.s32.totalorder %s19, 6
    %s26 = sphi 0, %s38
    %s27 = sphi 0, %s34
    %s28 = sphi 0, %s26
    %s29 = sphi 0, %s27
    %s30 = sphi 0, %s28
    %s31 = sphi 0, %s29
    %s41 = sphi 0, %s43
    %s44 = sphi 0, %s41
    %s45 = sphi 0, %s44
    %s61 = sphi 0, %s45
    %s67 = sphi 0, %s69
    %s70 = sphi 0, %s67
    %s71 = sphi 0, %s70
    %s87 = sphi 0, %s71
    %s93 = sphi 0, %s95
    %s96 = sphi 0, %s93
    %s97 = sphi 0, %s96
    %s113 = sphi 0, %s97
    %s117 = sphi 0, %s117
    %s119 = sphi 0, %s117
    %s120 = sphi 0, %s119
    %s134 = sphi 0, %s120
    %s138 = sphi 0, %s138
    %s140 = sphi 0, %s138
    %s141 = sphi 0, %s140
    %s155 = sphi 0, %s141
    %s161 = sphi 0, %s163
    %s164 = sphi 0, %s161
    %s165 = sphi 0, %s164
    %s181 = sphi 0, %s165
    %s187 = sphi 0, %s189
    %s190 = sphi 0, %s187
    %s191 = sphi 0, %s190
    %s207 = sphi 0, %s191
    %s213 = sphi 0, %s215
    %s216 = sphi 0, %s213
    %s217 = sphi 0, %s216
    %s233 = sphi 0, %s217
    %s239 = sphi 0, %s241
    %s242 = sphi 0, %s239
    %s243 = sphi 0, %s242
    %s259 = sphi 0, %s243
    %s263 = sphi 0, %s263
    %s265 = sphi 0, %s263
    %s266 = sphi 0, %s265
    %s280 = sphi 0, %s266
    %s284 = sphi 0, %s284
    %s286 = sphi 0, %s284
    %s287 = sphi 0, %s286
    %s301 = sphi 0, %s287
    %s307 = sphi 0, %s309
    %s310 = sphi 0, %s307
    %s311 = sphi 0, %s310
    %s327 = sphi 0, %s311
    %s333 = sphi 0, %s335
    %s336 = sphi 0, %s333
    %s337 = sphi 0, %s336
    %s353 = sphi 0, %s337
    %s359 = sphi 0, %s361
    %s362 = sphi 0, %s359
    %s363 = sphi 0, %s362
    %s379 = sphi 0, %s363
  $region4: #{forward.1} parent=0 // loop_header_branch
    %22 = sbr.rel (%p20) target = $region8
  $region5: #{forward.1} parent=0 // loop_body
    %s24 = ssub.s32 %s19, 1
    %s25 = ssub.s32 %s19, 2
    %s32 = sadd.s32 1, %s27
    %p33 = scmp.ge.s32.totalorder %s32, 2
    %s34 = scalar_select %p33, 0, %s32
    %s35 = sadd.s32 1, %s26
    %s36 = scalar_select %p33, %s35, %s26
    %p37 = scmp.ge.s32.totalorder %s36, 2
    %s38 = scalar_select %p37, 0, %s36
    %s39 = ssub.s32 %s26, %s38
    %p40 = scmp.eq.s32.totalorder %s39, 0
    %s42 = sadd.s32 %s41, 1
    %s43 = scalar_select %p40, %s41, %s42
    %p46 = pneg %p40
    %p47 = scmp.eq.s32.totalorder %s19, 3
    %p48 = por %p46, %p47
    %p49 = scmp.ne.s32.totalorder %s41, %s44
    %p50 = scmp.eq.s32.totalorder %s19, 0
    %p51 = por %p49, %p50
    %p52 = scmp.ne.s32.totalorder %s41, %s44
    %p53 = scmp.eq.s32.totalorder %s24, 3
    %p54 = por %p52, %p53
    %p55 = scmp.ne.s32.totalorder %s44, %s45
    %p56 = scmp.eq.s32.totalorder %s24, 0
    %p57 = por %p55, %p56
    %p58 = scmp.ne.s32.totalorder %s44, %s45
    %p59 = scmp.eq.s32.totalorder %s25, 3
    %p60 = por %p58, %p59
    %p62 = scmp.ne.s32.totalorder %s45, %s61
    %p63 = scmp.eq.s32.totalorder %s25, 0
    %p64 = por %p62, %p63
    %s65 = ssub.s32 %s26, %s38
    %p66 = scmp.eq.s32.totalorder %s65, 0
    %s68 = sadd.s32 %s67, 1
    %s69 = scalar_select %p66, %s67, %s68
    %p72 = pneg %p66
    %p73 = scmp.eq.s32.totalorder %s19, 3
    %p74 = por %p72, %p73
    %p75 = scmp.ne.s32.totalorder %s67, %s70
    %p76 = scmp.eq.s32.totalorder %s19, 0
    %p77 = por %p75, %p76
    %p78 = scmp.ne.s32.totalorder %s67, %s70
    %p79 = scmp.eq.s32.totalorder %s24, 3
    %p80 = por %p78, %p79
    %p81 = scmp.ne.s32.totalorder %s70, %s71
    %p82 = scmp.eq.s32.totalorder %s24, 0
    %p83 = por %p81, %p82
    %p84 = scmp.ne.s32.totalorder %s70, %s71
    %p85 = scmp.eq.s32.totalorder %s25, 3
    %p86 = por %p84, %p85
    %p88 = scmp.ne.s32.totalorder %s71, %s87
    %p89 = scmp.eq.s32.totalorder %s25, 0
    %p90 = por %p88, %p89
    %s91 = ssub.s32 %s26, %s38
    %p92 = scmp.eq.s32.totalorder %s91, 0
    %s94 = sadd.s32 %s93, 1
    %s95 = scalar_select %p92, %s93, %s94
    %p98 = pneg %p92
    %p99 = scmp.eq.s32.totalorder %s19, 3
    %p100 = por %p98, %p99
    %p101 = scmp.ne.s32.totalorder %s93, %s96
    %p102 = scmp.eq.s32.totalorder %s19, 0
    %p103 = por %p101, %p102
    %p104 = scmp.ne.s32.totalorder %s93, %s96
    %p105 = scmp.eq.s32.totalorder %s24, 3
    %p106 = por %p104, %p105
    %p107 = scmp.ne.s32.totalorder %s96, %s97
    %p108 = scmp.eq.s32.totalorder %s24, 0
    %p109 = por %p107, %p108
    %p110 = scmp.ne.s32.totalorder %s96, %s97
    %p111 = scmp.eq.s32.totalorder %s25, 3
    %p112 = por %p110, %p111
    %p114 = scmp.ne.s32.totalorder %s97, %s113
    %p115 = scmp.eq.s32.totalorder %s25, 0
    %p116 = por %p114, %p115
    %s118 = sadd.s32 %s117, 1
    %p121 = scmp.eq.s32.totalorder %s19, 3
    %p122 = scmp.ne.s32.totalorder %s117, %s119
    %p123 = scmp.eq.s32.totalorder %s19, 0
    %p124 = por %p122, %p123
    %p125 = scmp.ne.s32.totalorder %s117, %s119
    %p126 = scmp.eq.s32.totalorder %s24, 3
    %p127 = por %p125, %p126
    %p128 = scmp.ne.s32.totalorder %s119, %s120
    %p129 = scmp.eq.s32.totalorder %s24, 0
    %p130 = por %p128, %p129
    %p131 = scmp.ne.s32.totalorder %s119, %s120
    %p132 = scmp.eq.s32.totalorder %s25, 3
    %p133 = por %p131, %p132
    %p135 = scmp.ne.s32.totalorder %s120, %s134
    %p136 = scmp.eq.s32.totalorder %s25, 0
    %p137 = por %p135, %p136
    %s139 = sadd.s32 %s138, 1
    %p142 = scmp.eq.s32.totalorder %s19, 3
    %p143 = scmp.ne.s32.totalorder %s138, %s140
    %p144 = scmp.eq.s32.totalorder %s19, 0
    %p145 = por %p143, %p144
    %p146 = scmp.ne.s32.totalorder %s138, %s140
    %p147 = scmp.eq.s32.totalorder %s24, 3
    %p148 = por %p146, %p147
    %p149 = scmp.ne.s32.totalorder %s140, %s141
    %p150 = scmp.eq.s32.totalorder %s24, 0
    %p151 = por %p149, %p150
    %p152 = scmp.ne.s32.totalorder %s140, %s141
    %p153 = scmp.eq.s32.totalorder %s25, 3
    %p154 = por %p152, %p153
    %p156 = scmp.ne.s32.totalorder %s141, %s155
    %p157 = scmp.eq.s32.totalorder %s25, 0
    %p158 = por %p156, %p157
    %s159 = ssub.s32 %s26, %s38
    %p160 = scmp.eq.s32.totalorder %s159, 0
    %s162 = sadd.s32 %s161, 1
    %s163 = scalar_select %p160, %s161, %s162
    %p166 = pneg %p160
    %p167 = scmp.eq.s32.totalorder %s19, 3
    %p168 = por %p166, %p167
    %p169 = scmp.ne.s32.totalorder %s161, %s164
    %p170 = scmp.eq.s32.totalorder %s19, 0
    %p171 = por %p169, %p170
    %p172 = scmp.ne.s32.totalorder %s161, %s164
    %p173 = scmp.eq.s32.totalorder %s24, 3
    %p174 = por %p172, %p173
    %p175 = scmp.ne.s32.totalorder %s164, %s165
    %p176 = scmp.eq.s32.totalorder %s24, 0
    %p177 = por %p175, %p176
    %p178 = scmp.ne.s32.totalorder %s164, %s165
    %p179 = scmp.eq.s32.totalorder %s25, 3
    %p180 = por %p178, %p179
    %p182 = scmp.ne.s32.totalorder %s165, %s181
    %p183 = scmp.eq.s32.totalorder %s25, 0
    %p184 = por %p182, %p183
    %s185 = ssub.s32 %s27, %s34
    %p186 = scmp.eq.s32.totalorder %s185, 0
    %s188 = sadd.s32 %s187, 1
    %s189 = scalar_select %p186, %s187, %s188
    %p192 = pneg %p186
    %p193 = scmp.eq.s32.totalorder %s19, 3
    %p194 = por %p192, %p193
    %p195 = scmp.ne.s32.totalorder %s187, %s190
    %p196 = scmp.eq.s32.totalorder %s19, 0
    %p197 = por %p195, %p196
    %p198 = scmp.ne.s32.totalorder %s187, %s190
    %p199 = scmp.eq.s32.totalorder %s24, 3
    %p200 = por %p198, %p199
    %p201 = scmp.ne.s32.totalorder %s190, %s191
    %p202 = scmp.eq.s32.totalorder %s24, 0
    %p203 = por %p201, %p202
    %p204 = scmp.ne.s32.totalorder %s190, %s191
    %p205 = scmp.eq.s32.totalorder %s25, 3
    %p206 = por %p204, %p205
    %p208 = scmp.ne.s32.totalorder %s191, %s207
    %p209 = scmp.eq.s32.totalorder %s25, 0
    %p210 = por %p208, %p209
    %s211 = ssub.s32 %s27, %s34
    %p212 = scmp.eq.s32.totalorder %s211, 0
    %s214 = sadd.s32 %s213, 1
    %s215 = scalar_select %p212, %s213, %s214
    %p218 = pneg %p212
    %p219 = scmp.eq.s32.totalorder %s19, 3
    %p220 = por %p218, %p219
    %p221 = scmp.ne.s32.totalorder %s213, %s216
    %p222 = scmp.eq.s32.totalorder %s19, 0
    %p223 = por %p221, %p222
    %p224 = scmp.ne.s32.totalorder %s213, %s216
    %p225 = scmp.eq.s32.totalorder %s24, 3
    %p226 = por %p224, %p225
    %p227 = scmp.ne.s32.totalorder %s216, %s217
    %p228 = scmp.eq.s32.totalorder %s24, 0
    %p229 = por %p227, %p228
    %p230 = scmp.ne.s32.totalorder %s216, %s217
    %p231 = scmp.eq.s32.totalorder %s25, 3
    %p232 = por %p230, %p231
    %p234 = scmp.ne.s32.totalorder %s217, %s233
    %p235 = scmp.eq.s32.totalorder %s25, 0
    %p236 = por %p234, %p235
    %s237 = ssub.s32 %s27, %s34
    %p238 = scmp.eq.s32.totalorder %s237, 0
    %s240 = sadd.s32 %s239, 1
    %s241 = scalar_select %p238, %s239, %s240
    %p244 = pneg %p238
    %p245 = scmp.eq.s32.totalorder %s19, 3
    %p246 = por %p244, %p245
    %p247 = scmp.ne.s32.totalorder %s239, %s242
    %p248 = scmp.eq.s32.totalorder %s19, 0
    %p249 = por %p247, %p248
    %p250 = scmp.ne.s32.totalorder %s239, %s242
    %p251 = scmp.eq.s32.totalorder %s24, 3
    %p252 = por %p250, %p251
    %p253 = scmp.ne.s32.totalorder %s242, %s243
    %p254 = scmp.eq.s32.totalorder %s24, 0
    %p255 = por %p253, %p254
    %p256 = scmp.ne.s32.totalorder %s242, %s243
    %p257 = scmp.eq.s32.totalorder %s25, 3
    %p258 = por %p256, %p257
    %p260 = scmp.ne.s32.totalorder %s243, %s259
    %p261 = scmp.eq.s32.totalorder %s25, 0
    %p262 = por %p260, %p261
    %s264 = sadd.s32 %s263, 1
    %p267 = scmp.eq.s32.totalorder %s19, 3
    %p268 = scmp.ne.s32.totalorder %s263, %s265
    %p269 = scmp.eq.s32.totalorder %s19, 0
    %p270 = por %p268, %p269
    %p271 = scmp.ne.s32.totalorder %s263, %s265
    %p272 = scmp.eq.s32.totalorder %s24, 3
    %p273 = por %p271, %p272
    %p274 = scmp.ne.s32.totalorder %s265, %s266
    %p275 = scmp.eq.s32.totalorder %s24, 0
    %p276 = por %p274, %p275
    %p277 = scmp.ne.s32.totalorder %s265, %s266
    %p278 = scmp.eq.s32.totalorder %s25, 3
    %p279 = por %p277, %p278
    %p281 = scmp.ne.s32.totalorder %s266, %s280
    %p282 = scmp.eq.s32.totalorder %s25, 0
    %p283 = por %p281, %p282
    %s285 = sadd.s32 %s284, 1
    %p288 = scmp.eq.s32.totalorder %s19, 3
    %p289 = scmp.ne.s32.totalorder %s284, %s286
    %p290 = scmp.eq.s32.totalorder %s19, 0
    %p291 = por %p289, %p290
    %p292 = scmp.ne.s32.totalorder %s284, %s286
    %p293 = scmp.eq.s32.totalorder %s24, 3
    %p294 = por %p292, %p293
    %p295 = scmp.ne.s32.totalorder %s286, %s287
    %p296 = scmp.eq.s32.totalorder %s24, 0
    %p297 = por %p295, %p296
    %p298 = scmp.ne.s32.totalorder %s286, %s287
    %p299 = scmp.eq.s32.totalorder %s25, 3
    %p300 = por %p298, %p299
    %p302 = scmp.ne.s32.totalorder %s287, %s301
    %p303 = scmp.eq.s32.totalorder %s25, 0
    %p304 = por %p302, %p303
    %s305 = ssub.s32 %s26, %s38
    %p306 = scmp.eq.s32.totalorder %s305, 0
    %s308 = sadd.s32 %s307, 1
    %s309 = scalar_select %p306, %s307, %s308
    %p312 = pneg %p306
    %p313 = scmp.eq.s32.totalorder %s19, 3
    %p314 = por %p312, %p313
    %p315 = scmp.ne.s32.totalorder %s307, %s310
    %p316 = scmp.eq.s32.totalorder %s19, 0
    %p317 = por %p315, %p316
    %p318 = scmp.ne.s32.totalorder %s307, %s310
    %p319 = scmp.eq.s32.totalorder %s24, 3
    %p320 = por %p318, %p319
    %p321 = scmp.ne.s32.totalorder %s310, %s311
    %p322 = scmp.eq.s32.totalorder %s24, 0
    %p323 = por %p321, %p322
    %p324 = scmp.ne.s32.totalorder %s310, %s311
    %p325 = scmp.eq.s32.totalorder %s25, 3
    %p326 = por %p324, %p325
    %p328 = scmp.ne.s32.totalorder %s311, %s327
    %p329 = scmp.eq.s32.totalorder %s25, 0
    %p330 = por %p328, %p329
    %s331 = ssub.s32 %s26, %s38
    %p332 = scmp.eq.s32.totalorder %s331, 0
    %s334 = sadd.s32 %s333, 1
    %s335 = scalar_select %p332, %s333, %s334
    %p338 = pneg %p332
    %p339 = scmp.eq.s32.totalorder %s19, 3
    %p340 = por %p338, %p339
    %p341 = scmp.ne.s32.totalorder %s333, %s336
    %p342 = scmp.eq.s32.totalorder %s19, 0
    %p343 = por %p341, %p342
    %p344 = scmp.ne.s32.totalorder %s333, %s336
    %p345 = scmp.eq.s32.totalorder %s24, 3
    %p346 = por %p344, %p345
    %p347 = scmp.ne.s32.totalorder %s336, %s337
    %p348 = scmp.eq.s32.totalorder %s24, 0
    %p349 = por %p347, %p348
    %p350 = scmp.ne.s32.totalorder %s336, %s337
    %p351 = scmp.eq.s32.totalorder %s25, 3
    %p352 = por %p350, %p351
    %p354 = scmp.ne.s32.totalorder %s337, %s353
    %p355 = scmp.eq.s32.totalorder %s25, 0
    %p356 = por %p354, %p355
    %s357 = ssub.s32 %s26, %s38
    %p358 = scmp.eq.s32.totalorder %s357, 0
    %s360 = sadd.s32 %s359, 1
    %s361 = scalar_select %p358, %s359, %s360
    %p364 = pneg %p358
    %p365 = scmp.eq.s32.totalorder %s19, 3
    %p366 = por %p364, %p365
    %p367 = scmp.ne.s32.totalorder %s359, %s362
    %p368 = scmp.eq.s32.totalorder %s19, 0
    %p369 = por %p367, %p368
    %p370 = scmp.ne.s32.totalorder %s359, %s362
    %p371 = scmp.eq.s32.totalorder %s24, 3
    %p372 = por %p370, %p371
    %p373 = scmp.ne.s32.totalorder %s362, %s363
    %p374 = scmp.eq.s32.totalorder %s24, 0
    %p375 = por %p373, %p374
    %p376 = scmp.ne.s32.totalorder %s362, %s363
    %p377 = scmp.eq.s32.totalorder %s25, 3
    %p378 = por %p376, %p377
    %p380 = scmp.ne.s32.totalorder %s363, %s379
    %p381 = scmp.eq.s32.totalorder %s25, 0
    %p382 = por %p380, %p381
    %p383 = scmp.le.s32.totalorder 1, %s19
    %p384 = scmp.lt.s32.totalorder %s19, 5
    %p385 = pnand %p383, %p384
    %p386 = pneg %p385
    // Predicated region
    $region9: #{forward.1} parent=5 // pred_check
      _
    $region10: #{forward.1} parent=5 // pred_check_branch
      %388 = sbr.rel (%p385) target = $region12
    $region11: #{forward.1} parent=5 // pred_region
      %s389 = ssub.s32 %s19, 1
      // Predicated region
      $region13: #{forward.1} parent=11 // pred_check
        %p390 = pneg %p130
      $region14: #{forward.1} parent=11 // pred_check_branch
        %392 = sbr.rel (%p390) target = $region16
      $region15: #{forward.1} parent=11 // pred_region
        _
      $region16: #{forward.1} parent=11 // pred_fallthru
        _
      // Predicated region
      $region17: #{forward.1} parent=11 // pred_check
        %p393 = pneg %p151
      $region18: #{forward.1} parent=11 // pred_check_branch
        %395 = sbr.rel (%p393) target = $region20
      $region19: #{forward.1} parent=11 // pred_region
        _
      $region20: #{forward.1} parent=11 // pred_fallthru
        _
      // Predicated region
      $region21: #{forward.1} parent=11 // pred_check
        %p396 = pneg %p276
      $region22: #{forward.1} parent=11 // pred_check_branch
        %398 = sbr.rel (%p396) target = $region24
      $region23: #{forward.1} parent=11 // pred_region
        _
      $region24: #{forward.1} parent=11 // pred_fallthru
        _
      // Predicated region
      $region25: #{forward.1} parent=11 // pred_check
        %p399 = pneg %p297
      $region26: #{forward.1} parent=11 // pred_check_branch
        %401 = sbr.rel (%p399) target = $region28
      $region27: #{forward.1} parent=11 // pred_region
        _
      $region28: #{forward.1} parent=11 // pred_fallthru
        _
    $region12: #{forward.1} parent=5 // pred_fallthru
      _
    %p402 = scmp.lt.s32.totalorder %s19, 4
    // Predicated region
    $region29: #{forward.1} parent=5 // pred_check
      %p403 = pneg %p402
    $region30: #{forward.1} parent=5 // pred_check_branch
      %405 = sbr.rel (%p403) target = $region32
    $region31: #{forward.1} parent=5 // pred_region
      // Predicated region
      $region33: #{forward.1} parent=31 // pred_check
        %p406 = pneg %p51
      $region34: #{forward.1} parent=31 // pred_check_branch
        %408 = sbr.rel (%p406) target = $region36
      $region35: #{forward.1} parent=31 // pred_region
        %p409 = scmp.lt.s32.totalorder %s26, 1
        %s410 = scalar_select %p409, %s26, 1
        %s411 = smul.addr %s410, 8
        %s412 = scalar_lea.vmem %s0, %s411
      $region36: #{forward.1} parent=31 // pred_fallthru
        _
      // Predicated region
      $region37: #{forward.1} parent=31 // pred_check
        %p413 = pneg %p77
      $region38: #{forward.1} parent=31 // pred_check_branch
        %415 = sbr.rel (%p413) target = $region40
      $region39: #{forward.1} parent=31 // pred_region
        %p416 = scmp.lt.s32.totalorder %s26, 1
        %s417 = scalar_select %p416, %s26, 1
        %s418 = smul.addr %s417, 8
        %s419 = scalar_lea.vmem %s1, %s418
      $region40: #{forward.1} parent=31 // pred_fallthru
        _
      // Predicated region
      $region41: #{forward.1} parent=31 // pred_check
        %p420 = pneg %p103
      $region42: #{forward.1} parent=31 // pred_check_branch
        %422 = sbr.rel (%p420) target = $region44
      $region43: #{forward.1} parent=31 // pred_region
        %p423 = scmp.lt.s32.totalorder %s26, 1
        %s424 = scalar_select %p423, %s26, 1
        %s425 = smul.addr %s424, 8
        %s426 = scalar_lea.vmem %s2, %s425
      $region44: #{forward.1} parent=31 // pred_fallthru
        _
      // Predicated region
      $region45: #{forward.1} parent=31 // pred_check
        %p427 = pneg %p171
      $region46: #{forward.1} parent=31 // pred_check_branch
        %429 = sbr.rel (%p427) target = $region48
      $region47: #{forward.1} parent=31 // pred_region
        %p430 = scmp.lt.s32.totalorder %s26, 1
        %s431 = scalar_select %p430, %s26, 1
        %s432 = scalar_lea.vmem %s5, %s431
      $region48: #{forward.1} parent=31 // pred_fallthru
        _
      // Predicated region
      $region49: #{forward.1} parent=31 // pred_check
        %p433 = pneg %p197
      $region50: #{forward.1} parent=31 // pred_check_branch
        %435 = sbr.rel (%p433) target = $region52
      $region51: #{forward.1} parent=31 // pred_region
        %p436 = scmp.lt.s32.totalorder %s27, 1
        %s437 = scalar_select %p436, %s27, 1
        %s438 = smul.addr %s437, 8
        %s439 = smul.addr %s438, 4
        %s440 = scalar_lea.vmem %s6, %s439
      $region52: #{forward.1} parent=31 // pred_fallthru
        _
      // Predicated region
      $region53: #{forward.1} parent=31 // pred_check
        %p441 = pneg %p223
      $region54: #{forward.1} parent=31 // pred_check_branch
        %443 = sbr.rel (%p441) target = $region56
      $region55: #{forward.1} parent=31 // pred_region
        %p444 = scmp.lt.s32.totalorder %s27, 1
        %s445 = scalar_select %p444, %s27, 1
        %s446 = smul.addr %s445, 8
        %s447 = smul.addr %s446, 4
        %s448 = scalar_lea.vmem %s7, %s447
      $region56: #{forward.1} parent=31 // pred_fallthru
        _
      // Predicated region
      $region57: #{forward.1} parent=31 // pred_check
        %p449 = pneg %p249
      $region58: #{forward.1} parent=31 // pred_check_branch
        %451 = sbr.rel (%p449) target = $region60
      $region59: #{forward.1} parent=31 // pred_region
        %p452 = scmp.lt.s32.totalorder %s27, 1
        %s453 = scalar_select %p452, %s27, 1
        %s454 = smul.addr %s453, 8
        %s455 = scalar_lea.vmem %s8, %s454
      $region60: #{forward.1} parent=31 // pred_fallthru
        _
      // Predicated region
      $region61: #{forward.1} parent=31 // pred_check
        %p456 = pneg %p317
      $region62: #{forward.1} parent=31 // pred_check_branch
        %458 = sbr.rel (%p456) target = $region64
      $region63: #{forward.1} parent=31 // pred_region
        %p459 = scmp.lt.s32.totalorder %s26, 1
        %s460 = scalar_select %p459, %s26, 1
        %s461 = smul.addr %s460, 8
        %s462 = scalar_lea.vmem %s11, %s461
      $region64: #{forward.1} parent=31 // pred_fallthru
        _
      // Predicated region
      $region65: #{forward.1} parent=31 // pred_check
        %p463 = pneg %p343
      $region66: #{forward.1} parent=31 // pred_check_branch
        %465 = sbr.rel (%p463) target = $region68
      $region67: #{forward.1} parent=31 // pred_region
        %p466 = scmp.lt.s32.totalorder %s26, 1
        %s467 = scalar_select %p466, %s26, 1
        %s468 = smul.addr %s467, 8
        %s469 = scalar_lea.vmem %s12, %s468
      $region68: #{forward.1} parent=31 // pred_fallthru
        _
    $region32: #{forward.1} parent=5 // pred_fallthru
      _
    %p470 = scmp.le.s32.totalorder 1, %s19
    %p471 = scmp.lt.s32.totalorder %s19, 5
    %p472 = pnand %p470, %p471
    %p473 = pneg %p472
    // Predicated region
    $region69: #{forward.1} parent=5 // pred_check
      _
    $region70: #{forward.1} parent=5 // pred_check_branch
      %475 = sbr.rel (%p472) target = $region72
    $region71: #{forward.1} parent=5 // pred_region
      %s476 = ssub.s32 %s19, 1
      %p477 = scmp.lt.s32.totalorder %s28, 1
      %s478 = scalar_select %p477, %s28, 1
      %s479 = smul.addr %s478, 8
      %s480 = scalar_lea.vmem %s0, %s479
      %p481 = pneg %p57
      %p482 = pneg %p54
      %p483 = scmp.lt.s32.totalorder %s28, 1
      %s484 = scalar_select %p483, %s28, 1
      %s485 = smul.addr %s484, 8
      %s486 = scalar_lea.vmem %s1, %s485
      %p487 = pneg %p83
      %p488 = pneg %p80
      %p489 = scmp.lt.s32.totalorder %s28, 1
      %s490 = scalar_select %p489, %s28, 1
      %s491 = smul.addr %s490, 8
      %s492 = scalar_lea.vmem %s2, %s491
      %p493 = pneg %p109
      %p494 = pneg %p106
      %p495 = pneg %p130
      %p496 = pneg %p127
      %p497 = pneg %p151
      %p498 = pneg %p148
      %p499 = scmp.lt.s32.totalorder %s28, 1
      %s500 = scalar_select %p499, %s28, 1
      %s501 = scalar_lea.vmem %s5, %s500
      %p502 = pneg %p177
      %p503 = pneg %p174
      %p504 = scmp.lt.s32.totalorder %s29, 1
      %s505 = scalar_select %p504, %s29, 1
      %s506 = smul.addr %s505, 8
      %s507 = smul.addr %s506, 4
      %s508 = scalar_lea.vmem %s6, %s507
      %p509 = pneg %p203
      %p510 = pneg %p200
      %p511 = scmp.lt.s32.totalorder %s29, 1
      %s512 = scalar_select %p511, %s29, 1
      %s513 = smul.addr %s512, 8
      %s514 = smul.addr %s513, 4
      %s515 = scalar_lea.vmem %s7, %s514
      %p516 = pneg %p229
      %p517 = pneg %p226
      %p518 = scmp.lt.s32.totalorder %s29, 1
      %s519 = scalar_select %p518, %s29, 1
      %s520 = smul.addr %s519, 8
      %s521 = scalar_lea.vmem %s8, %s520
      %p522 = pneg %p255
      %p523 = pneg %p252
      %p524 = pneg %p276
      %p525 = pneg %p273
      %p526 = pneg %p297
      %p527 = pneg %p294
      %p528 = scmp.lt.s32.totalorder %s28, 1
      %s529 = scalar_select %p528, %s28, 1
      %s530 = smul.addr %s529, 8
      %s531 = scalar_lea.vmem %s11, %s530
      %p532 = pneg %p323
      %p533 = pneg %p320
      %p534 = scmp.lt.s32.totalorder %s28, 1
      %s535 = scalar_select %p534, %s28, 1
      %s536 = smul.addr %s535, 8
      %s537 = scalar_lea.vmem %s12, %s536
      %p538 = pneg %p349
      %p539 = pneg %p346
      %p540 = pneg %p375
      %p541 = pneg %p372
      %p542 = scmp.lt.s32.totalorder %s28, 1
      %s543 = scalar_select %p542, %s28, 1
      %s544 = smul.addr %s543, 8
      %s545 = scalar_lea.vmem %s13, %s544
      %p546 = scmp.lt.s32.totalorder %s28, 1
      %s547 = scalar_select %p546, %s28, 1
      %s548 = smul.addr %s547, 8
      %s549 = scalar_lea.vmem %s0, %s548
      %p550 = scmp.lt.s32.totalorder %s28, 1
      %s551 = scalar_select %p550, %s28, 1
      %s552 = smul.addr %s551, 8
      %s553 = scalar_lea.vmem %s1, %s552
      %p554 = scmp.lt.s32.totalorder %s28, 1
      %s555 = scalar_select %p554, %s28, 1
      %s556 = smul.addr %s555, 8
      %s557 = scalar_lea.vmem %s2, %s556
      %p558 = scmp.lt.s32.totalorder %s28, 1
      %s559 = scalar_select %p558, %s28, 1
      %s560 = scalar_lea.vmem %s5, %s559
      %p561 = scmp.lt.s32.totalorder %s29, 1
      %s562 = scalar_select %p561, %s29, 1
      %s563 = smul.addr %s562, 8
      %s564 = smul.addr %s563, 4
      %s565 = scalar_lea.vmem %s6, %s564
      %p566 = scmp.lt.s32.totalorder %s29, 1
      %s567 = scalar_select %p566, %s29, 1
      %s568 = smul.addr %s567, 8
      %s569 = smul.addr %s568, 4
      %s570 = scalar_lea.vmem %s7, %s569
      %p571 = scmp.lt.s32.totalorder %s29, 1
      %s572 = scalar_select %p571, %s29, 1
      %s573 = smul.addr %s572, 8
      %s574 = scalar_lea.vmem %s8, %s573
      %p575 = scmp.lt.s32.totalorder %s28, 1
      %s576 = scalar_select %p575, %s28, 1
      %s577 = smul.addr %s576, 8
      %s578 = scalar_lea.vmem %s11, %s577
      %p579 = scmp.lt.s32.totalorder %s28, 1
      %s580 = scalar_select %p579, %s28, 1
      %s581 = smul.addr %s580, 8
      %s582 = scalar_lea.vmem %s12, %s581
      %p583 = scmp.lt.s32.totalorder %s28, 1
      %s584 = scalar_select %p583, %s28, 1
      %s585 = smul.addr %s584, 8
      %s586 = scalar_lea.vmem %s13, %s585
      %p588 = scmp.eq.s32.totalorder %s29, 0
      // Predicated region
      $region73: #{forward.1} parent=71 // pred_check
        %p589 = pneg %p588
      $region74: #{forward.1} parent=71 // pred_check_branch
        %591 = sbr.rel (%p589) target = $region76
      $region75: #{forward.1} parent=71 // pred_region
        %v592 = vld [vmem:[%s549] sm:$0xff]
        %v593 = vld [vmem:[%s553] sm:$0xff]
        %v594 = vadd.f32 %v592, %v593
        %v595 = vld [vmem:[%s557] sm:$0xff]
        %v596 = vadd.f32 %v594, %v595
        %v597 = vld [vmem:[%s3] sm:$0x1]
        %v598 = vld [vmem:[%s4] sm:$0x1]
        %vm599 = vcmask 261120
        %v600 = vsel %vm599, %v596, 0.0
        %601 = vadd.xlane.f32.xlu0 %v600
        %v602 = vpop.xlane.xlu0 %601
        %v603 = vrcp.pop 32.0
        %v604 = vmul.f32 %v602, %v603
        %v605 = vsub.f32 %v596, %v604
        %v606 = vmul.f32 %v605, %v605
        %v607 = vsel %vm599, %v606, 0.0
        %608 = vadd.xlane.f32.xlu0 %v607
        %v609 = vpop.xlane.xlu0 %608
        %v610 = vmul.f32 %v609, %v603
        %v611 = vadd.f32 %v610, 1e-05
        %v612 = vrsqrt.pop %v611
        %v613 = vmul.f32 %v605, %v612
        %v615 = vlaneseq
        %v616 = vshrl.u32 %v615, 7
        %v617 = vsub.s32 0, %v616
        %v618 = vrot.slane %v597, %v617
        %v620 = vmul.f32 %v613, %v618
        %v622 = vlaneseq
        %v623 = vshrl.u32 %v622, 7
        %v624 = vsub.s32 0, %v623
        %v625 = vrot.slane %v598, %v624
        %v627 = vadd.f32 %v620, %v625
        %628 = vst.msk [vmem:[#allocation2] sm:$0xff] %vm599, %v627
      $region76: #{forward.1} parent=71 // pred_fallthru
        _
      %v629 = vld [vmem:[%s565] sm:$0xff]
      %v630 = vld [vmem:[%s565 + $0x8] sm:$0xff]
      %v631 = vld [vmem:[%s565 + $0x10] sm:$0xff]
      %v632 = vld [vmem:[%s565 + $0x18] sm:$0xff]
      %v633 = vld [vmem:[%s570] sm:$0xf]
      %v634 = vld [vmem:[%s570 + $0x4] sm:$0xf]
      %v635 = vld [vmem:[%s570 + $0x8] sm:$0xf]
      %v636 = vld [vmem:[%s570 + $0xc] sm:$0xf]
      %v637 = vld [vmem:[%s570 + $0x10] sm:$0xf]
      %v638 = vld [vmem:[%s570 + $0x14] sm:$0xf]
      %v639 = vld [vmem:[%s570 + $0x18] sm:$0xf]
      %v640 = vld [vmem:[%s570 + $0x1c] sm:$0xf]
      %v641 = vld [vmem:[%s574] sm:$0xff]
      %v642 = vld [vmem:[#allocation2] sm:$0xff]
      %v643 = vpack.c.bf16 %v642, %v642
      %v644 = vlaneseq
      %v645 = vshrl.u32 %v644, 7
      %v646 = vsub.s32 0, %v645
      %v647 = vrot.slane %v641, %v646
      %v652 = vunpack.c.l.b16 %v629
      %v653 = vunpack.c.l.b16 %v630
      %v654 = vunpack.c.l.b16 %v631
      %v655 = vunpack.c.l.b16 %v632
      %v656 = vpack.c.b16 %v653, %v652
      %v657 = vpack.c.b16 %v655, %v654
      %vm660 = vcmask 261120
      %v662 = vsel %vm660, %v643, 0
      %664 = vmatprep.subr.bf16.mxu0 0
      %665 = vmatpush1.bf16.msra.mxu0 0
      %666 = vmatprep.subr.bf16.mxu0 0
      %667 = vmatpush1.bf16.msra.mxu0 0
      %668 = vmatprep.subr.bf16.mxu0 0
      %669 = vmatpush1.bf16.msra.mxu0 0
      %670 = vmatprep.subr.bf16.mxu0 0
      %671 = vmatpush1.bf16.msra.mxu0 0
      %672 = vmatprep.subr.bf16.mxu0 0
      %673 = vmatpush1.bf16.msra.mxu0 0
      %674 = vmatprep.subr.bf16.mxu0 0
      %675 = vmatpush1.bf16.msra.mxu0 0
      %676 = vmatprep.subr.bf16.mxu0 0
      %677 = vmatpush1.bf16.msra.mxu0 %v657
      %678 = vmatprep.subr.bf16.mxu0 0
      %679 = vmatpush1.bf16.msra.mxu0 %v656
      %680 = vmatprep.subr.bf16.mxu0 0
      %681 = vmatpush2.bf16.msra.mxu0 0
      %682 = vmatprep.subr.bf16.mxu0 0
      %683 = vmatpush2.bf16.msra.mxu0 0
      %684 = vmatprep.subr.bf16.mxu0 0
      %685 = vmatpush2.bf16.msra.mxu0 0
      %686 = vmatprep.subr.bf16.mxu0 0
      %687 = vmatpush2.bf16.msra.mxu0 0
      %688 = vmatprep.subr.bf16.mxu0 0
      %689 = vmatpush2.bf16.msra.mxu0 0
      %690 = vmatprep.subr.bf16.mxu0 0
      %691 = vmatpush2.bf16.msra.mxu0 0
      %692 = vmatprep.subr.bf16.mxu0 0
      %693 = vmatpush2.bf16.msra.mxu0 0
      %694 = vmatprep.subr.bf16.mxu0 0
      %695 = vmatpush2.bf16.msra.mxu0 0
      %696 = vmatprep.mubr.bf16.mxu0 0
      %697 = vmatmul.mubr.bf16.gmra.mxu0 %v662
      %v698 = vpop.f32.mrf.mxu0
      %v699 = vadd.f32 %v647, %v698
      %v700 = vpop.f32.mrf.mxu0
      %v701 = vpop.f32.mrf.mxu0
      %v702 = vpop.f32.mrf.mxu0
      %703 = vdwg.mxu0
      %705 = vrot.lane.b32.xlu0 %v699, 112
      %v706 = vpop.permute.xlu0 %705
      %708 = vrot.lane.b32.xlu0 %v699, 96
      %v709 = vpop.permute.xlu0 %708
      %711 = vrot.lane.b32.xlu0 %v699, 80
      %v712 = vpop.permute.xlu0 %711
      %714 = vrot.lane.b32.xlu0 %v699, 64
      %v715 = vpop.permute.xlu0 %714
      %717 = vrot.lane.b32.xlu0 %v699, 48
      %v718 = vpop.permute.xlu0 %717
      %v720 = vcombine.low %v699, %v709
      %v721 = vcombine.high %v699, %v709
      %v723 = vunpack.c.l.s4 1983009808
      %v724 = vunpack.c.0.s8 %v723
      %v725 = vlaneseq
      %v726 = vshrl.u32 %v725, 7
      %v727 = vsub.s32 %v724, %v726
      %v728 = vrot.slane %v720, %v727
      %v730 = vunpack.c.l.s4 1983009808
      %v731 = vunpack.c.0.s8 %v730
      %v732 = vlaneseq
      %v733 = vshrl.u32 %v732, 7
      %v734 = vsub.s32 %v731, %v733
      %v735 = vrot.slane %v721, %v734
      %v736 = vcombine.low %v706, %v712
      %v737 = vcombine.high %v706, %v712
      %v739 = vunpack.c.l.s4 1983009808
      %v740 = vunpack.c.0.s8 %v739
      %v741 = vlaneseq
      %v742 = vshrl.u32 %v741, 7
      %v743 = vsub.s32 %v740, %v742
      %v744 = vrot.slane %v736, %v743
      %v746 = vunpack.c.l.s4 1983009808
      %v747 = vunpack.c.0.s8 %v746
      %v748 = vlaneseq
      %v749 = vshrl.u32 %v748, 7
      %v750 = vsub.s32 %v747, %v749
      %v751 = vrot.slane %v737, %v750
      %v752 = vcombine.high %v715, 0.0
      %v754 = vunpack.c.l.s4 1983009808
      %v755 = vunpack.c.0.s8 %v754
      %v756 = vlaneseq
      %v757 = vshrl.u32 %v756, 7
      %v758 = vsub.s32 %v755, %v757
      %v759 = vrot.slane %v715, %v758
      %v761 = vunpack.c.l.s4 1983009808
      %v762 = vunpack.c.0.s8 %v761
      %v763 = vlaneseq
      %v764 = vshrl.u32 %v763, 7
      %v765 = vsub.s32 %v762, %v764
      %v766 = vrot.slane %v752, %v765
      %v767 = vcombine.high %v718, 0.0
      %v769 = vunpack.c.l.s4 1983009808
      %v770 = vunpack.c.0.s8 %v769
      %v771 = vlaneseq
      %v772 = vshrl.u32 %v771, 7
      %v773 = vsub.s32 %v770, %v772
      %v774 = vrot.slane %v718, %v773
      %v776 = vunpack.c.l.s4 1983009808
      %v777 = vunpack.c.0.s8 %v776
      %v778 = vlaneseq
      %v779 = vshrl.u32 %v778, 7
      %v780 = vsub.s32 %v777, %v779
      %v781 = vrot.slane %v767, %v780
      %v782 = vcombine.low %v728, %v744
      %v783 = vcombine.high %v728, %v744
      %v785 = vunpack.c.l.s4 1934713408
      %v786 = vunpack.c.0.s8 %v785
      %v787 = vlaneseq
      %v788 = vshrl.u32 %v787, 7
      %v789 = vsub.s32 %v786, %v788
      %v790 = vrot.slane %v782, %v789
      %v792 = vunpack.c.l.s4 1934713408
      %v793 = vunpack.c.0.s8 %v792
      %v794 = vlaneseq
      %v795 = vshrl.u32 %v794, 7
      %v796 = vsub.s32 %v793, %v795
      %v797 = vrot.slane %v783, %v796
      %v798 = vcombine.low %v735, %v751
      %v799 = vcombine.high %v735, %v751
      %v801 = vunpack.c.l.s4 1934713408
      %v802 = vunpack.c.0.s8 %v801
      %v803 = vlaneseq
      %v804 = vshrl.u32 %v803, 7
      %v805 = vsub.s32 %v802, %v804
      %v806 = vrot.slane %v798, %v805
      %v808 = vunpack.c.l.s4 1934713408
      %v809 = vunpack.c.0.s8 %v808
      %v810 = vlaneseq
      %v811 = vshrl.u32 %v810, 7
      %v812 = vsub.s32 %v809, %v811
      %v813 = vrot.slane %v799, %v812
      %v814 = vcombine.low %v759, %v774
      %v815 = vcombine.high %v759, %v774
      %v817 = vunpack.c.l.s4 1934713408
      %v818 = vunpack.c.0.s8 %v817
      %v819 = vlaneseq
      %v820 = vshrl.u32 %v819, 7
      %v821 = vsub.s32 %v818, %v820
      %v822 = vrot.slane %v814, %v821
      %v824 = vunpack.c.l.s4 1934713408
      %v825 = vunpack.c.0.s8 %v824
      %v826 = vlaneseq
      %v827 = vshrl.u32 %v826, 7
      %v828 = vsub.s32 %v825, %v827
      %v829 = vrot.slane %v815, %v828
      %v830 = vcombine.low %v766, %v781
      %v831 = vcombine.high %v766, %v781
      %v833 = vunpack.c.l.s4 1934713408
      %v834 = vunpack.c.0.s8 %v833
      %v835 = vlaneseq
      %v836 = vshrl.u32 %v835, 7
      %v837 = vsub.s32 %v834, %v836
      %v838 = vrot.slane %v830, %v837
      %v840 = vunpack.c.l.s4 1934713408
      %v841 = vunpack.c.0.s8 %v840
      %v842 = vlaneseq
      %v843 = vshrl.u32 %v842, 7
      %v844 = vsub.s32 %v841, %v843
      %v845 = vrot.slane %v831, %v844
      %v846 = vcombine.low %v790, %v822
      %v847 = vcombine.high %v790, %v822
      %v848 = vcombine.low %v797, %v829
      %v849 = vcombine.high %v797, %v829
      %v850 = vcombine.low %v806, %v838
      %v851 = vcombine.high %v806, %v838
      %v852 = vcombine.low %v813, %v845
      %v853 = vcombine.high %v813, %v845
      %v854 = vcombine.low %v846, %v848
      %v855 = vcombine.high %v846, %v848
      %v857 = vunpack.c.l.s4 1983009808
      %v858 = vunpack.c.0.s8 %v857
      %v859 = vlaneseq
      %v860 = vshrl.u32 %v859, 7
      %v861 = vsub.s32 %v858, %v860
      %v862 = vrot.slane %v854, %v861
      %v864 = vunpack.c.l.s4 1983009808
      %v865 = vunpack.c.0.s8 %v864
      %v866 = vlaneseq
      %v867 = vshrl.u32 %v866, 7
      %v868 = vsub.s32 %v865, %v867
      %v869 = vrot.slane %v855, %v868
      %v870 = vcombine.low %v847, %v849
      %v871 = vcombine.high %v847, %v849
      %v873 = vunpack.c.l.s4 1983009808
      %v874 = vunpack.c.0.s8 %v873
      %v875 = vlaneseq
      %v876 = vshrl.u32 %v875, 7
      %v877 = vsub.s32 %v874, %v876
      %v878 = vrot.slane %v870, %v877
      %v880 = vunpack.c.l.s4 1983009808
      %v881 = vunpack.c.0.s8 %v880
      %v882 = vlaneseq
      %v883 = vshrl.u32 %v882, 7
      %v884 = vsub.s32 %v881, %v883
      %v885 = vrot.slane %v871, %v884
      %v886 = vcombine.low %v850, %v852
      %v887 = vcombine.high %v850, %v852
      %v889 = vunpack.c.l.s4 1983009808
      %v890 = vunpack.c.0.s8 %v889
      %v891 = vlaneseq
      %v892 = vshrl.u32 %v891, 7
      %v893 = vsub.s32 %v890, %v892
      %v894 = vrot.slane %v886, %v893
      %v896 = vunpack.c.l.s4 1983009808
      %v897 = vunpack.c.0.s8 %v896
      %v898 = vlaneseq
      %v899 = vshrl.u32 %v898, 7
      %v900 = vsub.s32 %v897, %v899
      %v901 = vrot.slane %v887, %v900
      %v902 = vcombine.low %v851, %v853
      %v903 = vcombine.high %v851, %v853
      %v905 = vunpack.c.l.s4 1983009808
      %v906 = vunpack.c.0.s8 %v905
      %v907 = vlaneseq
      %v908 = vshrl.u32 %v907, 7
      %v909 = vsub.s32 %v906, %v908
      %v910 = vrot.slane %v902, %v909
      %v912 = vunpack.c.l.s4 1983009808
      %v913 = vunpack.c.0.s8 %v912
      %v914 = vlaneseq
      %v915 = vshrl.u32 %v914, 7
      %v916 = vsub.s32 %v913, %v915
      %v917 = vrot.slane %v903, %v916
      %v918 = vcombine.low %v862, %v878
      %v919 = vcombine.high %v862, %v878
      %v921 = vunpack.c.l.s4 1934713408
      %v922 = vunpack.c.0.s8 %v921
      %v923 = vlaneseq
      %v924 = vshrl.u32 %v923, 7
      %v925 = vsub.s32 %v922, %v924
      %v926 = vrot.slane %v918, %v925
      %v928 = vunpack.c.l.s4 1934713408
      %v929 = vunpack.c.0.s8 %v928
      %v930 = vlaneseq
      %v931 = vshrl.u32 %v930, 7
      %v932 = vsub.s32 %v929, %v931
      %v933 = vrot.slane %v919, %v932
      %v934 = vcombine.low %v869, %v885
      %v936 = vunpack.c.l.s4 1934713408
      %v937 = vunpack.c.0.s8 %v936
      %v938 = vlaneseq
      %v939 = vshrl.u32 %v938, 7
      %v940 = vsub.s32 %v937, %v939
      %v941 = vrot.slane %v934, %v940
      %v942 = vcombine.low %v894, %v910
      %v943 = vcombine.high %v894, %v910
      %v945 = vunpack.c.l.s4 1934713408
      %v946 = vunpack.c.0.s8 %v945
      %v947 = vlaneseq
      %v948 = vshrl.u32 %v947, 7
      %v949 = vsub.s32 %v946, %v948
      %v950 = vrot.slane %v942, %v949
      %v952 = vunpack.c.l.s4 1934713408
      %v953 = vunpack.c.0.s8 %v952
      %v954 = vlaneseq
      %v955 = vshrl.u32 %v954, 7
      %v956 = vsub.s32 %v953, %v955
      %v957 = vrot.slane %v943, %v956
      %v958 = vcombine.low %v901, %v917
      %v960 = vunpack.c.l.s4 1934713408
      %v961 = vunpack.c.0.s8 %v960
      %v962 = vlaneseq
      %v963 = vshrl.u32 %v962, 7
      %v964 = vsub.s32 %v961, %v963
      %v965 = vrot.slane %v958, %v964
      %v966 = vcombine.low %v926, %v950
      %v967 = vcombine.high %v926, %v950
      %v968 = vcombine.low %v933, %v957
      %v969 = vcombine.high %v933, %v957
      %v970 = vcombine.low %v941, %v965
      %v971 = vcombine.high %v941, %v965
      %v972 = vpack.c.bf16 %v966, %v966
      %v973 = vpack.c.bf16 %v967, %v967
      %v974 = vpack.c.bf16 %v968, %v968
      %v975 = vpack.c.bf16 %v969, %v969
      %v976 = vpack.c.bf16 %v970, %v970
      %v977 = vpack.c.bf16 %v971, %v971
      %vm978 = vcmask 130048
      %v980 = vsel %vm978, %v972, 0
      %v983 = vsel %vm978, %v974, 0
      %985 = vmatprep.subr.bf16.mxu0 0
      %986 = vmatpush1.bf16.xpose.msra.mxu0 0
      %987 = vmatprep.subr.bf16.mxu0 0
      %988 = vmatpush1.bf16.xpose.msra.mxu0 0
      %989 = vmatprep.subr.bf16.mxu0 0
      %990 = vmatpush1.bf16.xpose.msra.mxu0 0
      %991 = vmatprep.subr.bf16.mxu0 0
      %992 = vmatpush1.bf16.xpose.msra.mxu0 0
      %993 = vmatprep.subr.bf16.mxu0 0
      %994 = vmatpush1.bf16.xpose.msra.mxu0 0
      %995 = vmatprep.subr.bf16.mxu0 0
      %996 = vmatpush1.bf16.xpose.msra.mxu0 0
      %997 = vmatprep.subr.bf16.mxu0 0
      %998 = vmatpush1.bf16.xpose.msra.mxu0 0
      %999 = vmatprep.subr.bf16.mxu0 0
      %1000 = vmatpush1.bf16.xpose.msra.mxu0 %v983
      %1001 = vmatprep.subr.bf16.mxu0 0
      %1002 = vmatpush2.bf16.xpose.msra.mxu0 0
      %1003 = vmatprep.subr.bf16.mxu0 0
      %1004 = vmatpush2.bf16.xpose.msra.mxu0 0
      %1005 = vmatprep.subr.bf16.mxu0 0
      %1006 = vmatpush2.bf16.xpose.msra.mxu0 0
      %1007 = vmatprep.subr.bf16.mxu0 0
      %1008 = vmatpush2.bf16.xpose.msra.mxu0 0
      %1009 = vmatprep.subr.bf16.mxu0 0
      %1010 = vmatpush2.bf16.xpose.msra.mxu0 0
      %1011 = vmatprep.subr.bf16.mxu0 0
      %1012 = vmatpush2.bf16.xpose.msra.mxu0 0
      %1013 = vmatprep.subr.bf16.mxu0 0
      %1014 = vmatpush2.bf16.xpose.msra.mxu0 0
      %1015 = vmatprep.subr.bf16.mxu0 0
      %1016 = vmatpush2.bf16.xpose.msra.mxu0 0
      %1017 = vmatprep.mubr.bf16.mxu0 0
      %1018 = vmatmul.mubr.bf16.gmra.mxu0 %v980
      %v1019 = vpop.f32.mrf.mxu0
      %v1020 = vadd.f32 0.0, %v1019
      %v1021 = vpop.f32.mrf.mxu0
      %v1022 = vpop.f32.mrf.mxu0
      %v1023 = vpop.f32.mrf.mxu0
      %1024 = vdwg.mxu0
      %v1026 = vsel %vm978, %v973, 0
      %v1029 = vsel %vm978, %v975, 0
      %1031 = vmatprep.subr.bf16.mxu0 0
      %1032 = vmatpush1.bf16.xpose.msra.mxu0 0
      %1033 = vmatprep.subr.bf16.mxu0 0
      %1034 = vmatpush1.bf16.xpose.msra.mxu0 0
      %1035 = vmatprep.subr.bf16.mxu0 0
      %1036 = vmatpush1.bf16.xpose.msra.mxu0 0
      %1037 = vmatprep.subr.bf16.mxu0 0
      %1038 = vmatpush1.bf16.xpose.msra.mxu0 0
      %1039 = vmatprep.subr.bf16.mxu0 0
      %1040 = vmatpush1.bf16.xpose.msra.mxu0 0
      %1041 = vmatprep.subr.bf16.mxu0 0
      %1042 = vmatpush1.bf16.xpose.msra.mxu0 0
      %1043 = vmatprep.subr.bf16.mxu0 0
      %1044 = vmatpush1.bf16.xpose.msra.mxu0 0
      %1045 = vmatprep.subr.bf16.mxu0 0
      %1046 = vmatpush1.bf16.xpose.msra.mxu0 %v1029
      %1047 = vmatprep.subr.bf16.mxu0 0
      %1048 = vmatpush2.bf16.xpose.msra.mxu0 0
      %1049 = vmatprep.subr.bf16.mxu0 0
      %1050 = vmatpush2.bf16.xpose.msra.mxu0 0
      %1051 = vmatprep.subr.bf16.mxu0 0
      %1052 = vmatpush2.bf16.xpose.msra.mxu0 0
      %1053 = vmatprep.subr.bf16.mxu0 0
      %1054 = vmatpush2.bf16.xpose.msra.mxu0 0
      %1055 = vmatprep.subr.bf16.mxu0 0
      %1056 = vmatpush2.bf16.xpose.msra.mxu0 0
      %1057 = vmatprep.subr.bf16.mxu0 0
      %1058 = vmatpush2.bf16.xpose.msra.mxu0 0
      %1059 = vmatprep.subr.bf16.mxu0 0
      %1060 = vmatpush2.bf16.xpose.msra.mxu0 0
      %1061 = vmatprep.subr.bf16.mxu0 0
      %1062 = vmatpush2.bf16.xpose.msra.mxu0 0
      %1063 = vmatprep.mubr.bf16.mxu0 0
      %1064 = vmatmul.mubr.bf16.gmra.mxu0 %v1026
      %v1065 = vpop.f32.mrf.mxu0
      %v1066 = vadd.f32 0.0, %v1065
      %v1067 = vpop.f32.mrf.mxu0
      %v1068 = vpop.f32.mrf.mxu0
      %v1069 = vpop.f32.mrf.mxu0
      %1070 = vdwg.mxu0
      %v1071 = vmul.f32 %v1020, 0.25
      %v1072 = vmul.f32 %v1066, 0.25
      %v1073 = vld [vmem:[%s560] sm:$0x1]
      %v1075 = vlaneseq
      %v1076 = vshrl.u32 %v1075, 7
      %v1077 = vsub.s32 0, %v1076
      %v1078 = vrot.slane %v1073, %v1077
      %v1080 = vadd.f32 %v1071, %v1078
      %v1081 = vadd.f32 %v1072, %v1078
      %vm1082 = vcmask 64512
      %v1083 = vsel %vm1082, %v1080, -inf
      %1084 = vmax.xlane.f32.xlu0 %v1083
      %v1085 = vpop.xlane.xlu0 %1084
      %v1086 = vsel %vm1082, %v1081, -inf
      %1087 = vmax.xlane.f32.xlu0 %v1086
      %v1088 = vpop.xlane.xlu0 %1087
      %v1089 = vsub.f32 %v1080, %v1085
      %v1090 = vsub.f32 %v1081, %v1088
      %v1091 = vmul.f32 %v1089, 1.442695
      %v1092 = vpow.pop %v1091
      %v1093 = vmul.f32 %v1090, 1.442695
      %v1094 = vpow.pop %v1093
      %v1095 = vsel %vm1082, %v1092, 0.0
      %1096 = vadd.xlane.f32.xlu0 %v1095
      %v1097 = vpop.xlane.xlu0 %1096
      %v1098 = vsel %vm1082, %v1094, 0.0
      %1099 = vadd.xlane.f32.xlu0 %v1098
      %v1100 = vpop.xlane.xlu0 %1099
      %v1101 = vrcp.pop %v1097
      %v1102 = vrcp.pop %v1100
      %v1103 = vmul.f32 %v1092, %v1101
      %v1104 = vmul.f32 %v1094, %v1102
      %v1105 = vpack.c.bf16 %v1103, %v1103
      %v1106 = vpack.c.bf16 %v1104, %v1104
      %v1108 = vsel %vm1082, %v1105, 0
      %vm1110 = vcmask 1043456
      %v1112 = vsel %vm1110, %v976, 0
      %1114 = vmatprep.subr.bf16.mxu0 0
      %1115 = vmatpush1.bf16.msra.mxu0 0
      %1116 = vmatprep.subr.bf16.mxu0 0
      %1117 = vmatpush1.bf16.msra.mxu0 0
      %1118 = vmatprep.subr.bf16.mxu0 0
      %1119 = vmatpush1.bf16.msra.mxu0 0
      %1120 = vmatprep.subr.bf16.mxu0 0
      %1121 = vmatpush1.bf16.msra.mxu0 0
      %1122 = vmatprep.subr.bf16.mxu0 0
      %1123 = vmatpush1.bf16.msra.mxu0 0
      %1124 = vmatprep.subr.bf16.mxu0 0
      %1125 = vmatpush1.bf16.msra.mxu0 0
      %1126 = vmatprep.subr.bf16.mxu0 0
      %1127 = vmatpush1.bf16.msra.mxu0 0
      %1128 = vmatprep.subr.bf16.mxu0 0
      %1129 = vmatpush1.bf16.msra.mxu0 %v1112
      %1130 = vmatprep.subr.bf16.mxu0 0
      %1131 = vmatpush2.bf16.msra.mxu0 0
      %1132 = vmatprep.subr.bf16.mxu0 0
      %1133 = vmatpush2.bf16.msra.mxu0 0
      %1134 = vmatprep.subr.bf16.mxu0 0
      %1135 = vmatpush2.bf16.msra.mxu0 0
      %1136 = vmatprep.subr.bf16.mxu0 0
      %1137 = vmatpush2.bf16.msra.mxu0 0
      %1138 = vmatprep.subr.bf16.mxu0 0
      %1139 = vmatpush2.bf16.msra.mxu0 0
      %1140 = vmatprep.subr.bf16.mxu0 0
      %1141 = vmatpush2.bf16.msra.mxu0 0
      %1142 = vmatprep.subr.bf16.mxu0 0
      %1143 = vmatpush2.bf16.msra.mxu0 0
      %1144 = vmatprep.subr.bf16.mxu0 0
      %1145 = vmatpush2.bf16.msra.mxu0 0
      %1146 = vmatprep.mubr.bf16.mxu0 0
      %1147 = vmatmul.mubr.bf16.gmra.mxu0 %v1108
      %v1148 = vpop.f32.mrf.mxu0
      %v1149 = vadd.f32 0.0, %v1148
      %v1150 = vpop.f32.mrf.mxu0
      %v1151 = vpop.f32.mrf.mxu0
      %v1152 = vpop.f32.mrf.mxu0
      %1153 = vdwg.mxu0
      %v1155 = vsel %vm1082, %v1106, 0
      %v1158 = vsel %vm1110, %v977, 0
      %1160 = vmatprep.subr.bf16.mxu0 0
      %1161 = vmatpush1.bf16.msra.mxu0 0
      %1162 = vmatprep.subr.bf16.mxu0 0
      %1163 = vmatpush1.bf16.msra.mxu0 0
      %1164 = vmatprep.subr.bf16.mxu0 0
      %1165 = vmatpush1.bf16.msra.mxu0 0
      %1166 = vmatprep.subr.bf16.mxu0 0
      %1167 = vmatpush1.bf16.msra.mxu0 0
      %1168 = vmatprep.subr.bf16.mxu0 0
      %1169 = vmatpush1.bf16.msra.mxu0 0
      %1170 = vmatprep.subr.bf16.mxu0 0
      %1171 = vmatpush1.bf16.msra.mxu0 0
      %1172 = vmatprep.subr.bf16.mxu0 0
      %1173 = vmatpush1.bf16.msra.mxu0 0
      %1174 = vmatprep.subr.bf16.mxu0 0
      %1175 = vmatpush1.bf16.msra.mxu0 %v1158
      %1176 = vmatprep.subr.bf16.mxu0 0
      %1177 = vmatpush2.bf16.msra.mxu0 0
      %1178 = vmatprep.subr.bf16.mxu0 0
      %1179 = vmatpush2.bf16.msra.mxu0 0
      %1180 = vmatprep.subr.bf16.mxu0 0
      %1181 = vmatpush2.bf16.msra.mxu0 0
      %1182 = vmatprep.subr.bf16.mxu0 0
      %1183 = vmatpush2.bf16.msra.mxu0 0
      %1184 = vmatprep.subr.bf16.mxu0 0
      %1185 = vmatpush2.bf16.msra.mxu0 0
      %1186 = vmatprep.subr.bf16.mxu0 0
      %1187 = vmatpush2.bf16.msra.mxu0 0
      %1188 = vmatprep.subr.bf16.mxu0 0
      %1189 = vmatpush2.bf16.msra.mxu0 0
      %1190 = vmatprep.subr.bf16.mxu0 0
      %1191 = vmatpush2.bf16.msra.mxu0 0
      %1192 = vmatprep.mubr.bf16.mxu0 0
      %1193 = vmatmul.mubr.bf16.gmra.mxu0 %v1155
      %v1194 = vpop.f32.mrf.mxu0
      %v1195 = vadd.f32 0.0, %v1194
      %v1196 = vpop.f32.mrf.mxu0
      %v1197 = vpop.f32.mrf.mxu0
      %v1198 = vpop.f32.mrf.mxu0
      %1199 = vdwg.mxu0
      %v1200 = vcombine.high %v1149, 0.0
      %v1202 = vunpack.c.l.s4 1983009808
      %v1203 = vunpack.c.0.s8 %v1202
      %v1204 = vlaneseq
      %v1205 = vshrl.u32 %v1204, 7
      %v1206 = vsub.s32 %v1203, %v1205
      %v1207 = vrot.slane %v1149, %v1206
      %v1209 = vunpack.c.l.s4 1983009808
      %v1210 = vunpack.c.0.s8 %v1209
      %v1211 = vlaneseq
      %v1212 = vshrl.u32 %v1211, 7
      %v1213 = vsub.s32 %v1210, %v1212
      %v1214 = vrot.slane %v1200, %v1213
      %v1215 = vcombine.high %v1195, 0.0
      %v1217 = vunpack.c.l.s4 1983009808
      %v1218 = vunpack.c.0.s8 %v1217
      %v1219 = vlaneseq
      %v1220 = vshrl.u32 %v1219, 7
      %v1221 = vsub.s32 %v1218, %v1220
      %v1222 = vrot.slane %v1195, %v1221
      %v1224 = vunpack.c.l.s4 1983009808
      %v1225 = vunpack.c.0.s8 %v1224
      %v1226 = vlaneseq
      %v1227 = vshrl.u32 %v1226, 7
      %v1228 = vsub.s32 %v1225, %v1227
      %v1229 = vrot.slane %v1215, %v1228
      %v1230 = vcombine.low %v1207, %v1222
      %v1231 = vcombine.high %v1207, %v1222
      %v1233 = vunpack.c.l.s4 1934713408
      %v1234 = vunpack.c.0.s8 %v1233
      %v1235 = vlaneseq
      %v1236 = vshrl.u32 %v1235, 7
      %v1237 = vsub.s32 %v1234, %v1236
      %v1238 = vrot.slane %v1230, %v1237
      %v1240 = vunpack.c.l.s4 1934713408
      %v1241 = vunpack.c.0.s8 %v1240
      %v1242 = vlaneseq
      %v1243 = vshrl.u32 %v1242, 7
      %v1244 = vsub.s32 %v1241, %v1243
      %v1245 = vrot.slane %v1231, %v1244
      %v1246 = vcombine.low %v1214, %v1229
      %v1247 = vcombine.high %v1214, %v1229
      %v1249 = vunpack.c.l.s4 1934713408
      %v1250 = vunpack.c.0.s8 %v1249
      %v1251 = vlaneseq
      %v1252 = vshrl.u32 %v1251, 7
      %v1253 = vsub.s32 %v1250, %v1252
      %v1254 = vrot.slane %v1246, %v1253
      %v1256 = vunpack.c.l.s4 1934713408
      %v1257 = vunpack.c.0.s8 %v1256
      %v1258 = vlaneseq
      %v1259 = vshrl.u32 %v1258, 7
      %v1260 = vsub.s32 %v1257, %v1259
      %v1261 = vrot.slane %v1247, %v1260
      %v1262 = vcombine.high %v1238, 0.0
      %v1263 = vcombine.high %v1245, 0.0
      %v1264 = vcombine.high %v1254, 0.0
      %v1265 = vcombine.high %v1261, 0.0
      %v1266 = vcombine.low %v1238, %v1245
      %v1268 = vunpack.c.l.s4 1983009808
      %v1269 = vunpack.c.0.s8 %v1268
      %v1270 = vlaneseq
      %v1271 = vshrl.u32 %v1270, 7
      %v1272 = vsub.s32 %v1269, %v1271
      %v1273 = vrot.slane %v1266, %v1272
      %v1274 = vcombine.low %v1262, %v1263
      %v1276 = vunpack.c.l.s4 1983009808
      %v1277 = vunpack.c.0.s8 %v1276
      %v1278 = vlaneseq
      %v1279 = vshrl.u32 %v1278, 7
      %v1280 = vsub.s32 %v1277, %v1279
      %v1281 = vrot.slane %v1274, %v1280
      %v1282 = vcombine.low %v1254, %v1261
      %v1284 = vunpack.c.l.s4 1983009808
      %v1285 = vunpack.c.0.s8 %v1284
      %v1286 = vlaneseq
      %v1287 = vshrl.u32 %v1286, 7
      %v1288 = vsub.s32 %v1285, %v1287
      %v1289 = vrot.slane %v1282, %v1288
      %v1290 = vcombine.low %v1264, %v1265
      %v1292 = vunpack.c.l.s4 1983009808
      %v1293 = vunpack.c.0.s8 %v1292
      %v1294 = vlaneseq
      %v1295 = vshrl.u32 %v1294, 7
      %v1296 = vsub.s32 %v1293, %v1295
      %v1297 = vrot.slane %v1290, %v1296
      %v1298 = vcombine.low %v1273, %v1281
      %v1300 = vunpack.c.l.s4 1934713408
      %v1301 = vunpack.c.0.s8 %v1300
      %v1302 = vlaneseq
      %v1303 = vshrl.u32 %v1302, 7
      %v1304 = vsub.s32 %v1301, %v1303
      %v1305 = vrot.slane %v1298, %v1304
      %v1306 = vcombine.low %v1289, %v1297
      %v1308 = vunpack.c.l.s4 1934713408
      %v1309 = vunpack.c.0.s8 %v1308
      %v1310 = vlaneseq
      %v1311 = vshrl.u32 %v1310, 7
      %v1312 = vsub.s32 %v1309, %v1311
      %v1313 = vrot.slane %v1306, %v1312
      %v1314 = vcombine.low %v1305, %v1313
      %v1315 = vcombine.high %v1305, %v1313
      %1317 = vrot.lane.b32.xlu0 %v1315, 16
      %v1318 = vpop.permute.xlu0 %1317
      %v1320 = vsel %vm978, %v1314, %v1318
      %v1321 = vpack.c.bf16 %v1320, %v1320
      %v1322 = vlaneseq
      %v1323 = vshrl.u32 %v1322, 7
      %v1324 = vsub.s32 1, %v1323
      %v1325 = vrot.slane %v641, %v1324
      %1326 = vrot.lane.b32.xlu0 %v656, 32
      %v1327 = vpop.permute.xlu0 %1326
      %1328 = vrot.lane.b32.xlu0 %v657, 32
      %v1329 = vpop.permute.xlu0 %1328
      %v1333 = vsel %vm660, %v1321, 0
      %1335 = vmatprep.subr.bf16.mxu0 0
      %1336 = vmatpush1.bf16.msra.mxu0 0
      %1337 = vmatprep.subr.bf16.mxu0 0
      %1338 = vmatpush1.bf16.msra.mxu0 0
      %1339 = vmatprep.subr.bf16.mxu0 0
      %1340 = vmatpush1.bf16.msra.mxu0 0
      %1341 = vmatprep.subr.bf16.mxu0 0
      %1342 = vmatpush1.bf16.msra.mxu0 0
      %1343 = vmatprep.subr.bf16.mxu0 0
      %1344 = vmatpush1.bf16.msra.mxu0 0
      %1345 = vmatprep.subr.bf16.mxu0 0
      %1346 = vmatpush1.bf16.msra.mxu0 0
      %1347 = vmatprep.subr.bf16.mxu0 0
      %1348 = vmatpush1.bf16.msra.mxu0 %v1329
      %1349 = vmatprep.subr.bf16.mxu0 0
      %1350 = vmatpush1.bf16.msra.mxu0 %v1327
      %1351 = vmatprep.subr.bf16.mxu0 0
      %1352 = vmatpush2.bf16.msra.mxu0 0
      %1353 = vmatprep.subr.bf16.mxu0 0
      %1354 = vmatpush2.bf16.msra.mxu0 0
      %1355 = vmatprep.subr.bf16.mxu0 0
      %1356 = vmatpush2.bf16.msra.mxu0 0
      %1357 = vmatprep.subr.bf16.mxu0 0
      %1358 = vmatpush2.bf16.msra.mxu0 0
      %1359 = vmatprep.subr.bf16.mxu0 0
      %1360 = vmatpush2.bf16.msra.mxu0 0
      %1361 = vmatprep.subr.bf16.mxu0 0
      %1362 = vmatpush2.bf16.msra.mxu0 0
      %1363 = vmatprep.subr.bf16.mxu0 0
      %1364 = vmatpush2.bf16.msra.mxu0 0
      %1365 = vmatprep.subr.bf16.mxu0 0
      %1366 = vmatpush2.bf16.msra.mxu0 0
      %1367 = vmatprep.mubr.bf16.mxu0 0
      %1368 = vmatmul.mubr.bf16.gmra.mxu0 %v1333
      %v1369 = vpop.f32.mrf.mxu0
      %v1370 = vadd.f32 %v1325, %v1369
      %v1371 = vpop.f32.mrf.mxu0
      %v1372 = vpop.f32.mrf.mxu0
      %v1373 = vpop.f32.mrf.mxu0
      %1374 = vdwg.mxu0
      %v1375 = vadd.f32 %v642, %v1370
      %v1376 = vsel %vm660, %v1375, 0.0
      %1377 = vadd.xlane.f32.xlu0 %v1376
      %v1378 = vpop.xlane.xlu0 %1377
      %v1379 = vrcp.pop 32.0
      %v1380 = vmul.f32 %v1378, %v1379
      %v1381 = vsub.f32 %v1375, %v1380
      %v1382 = vmul.f32 %v1381, %v1381
      %v1383 = vsel %vm660, %v1382, 0.0
      %1384 = vadd.xlane.f32.xlu0 %v1383
      %v1385 = vpop.xlane.xlu0 %1384
      %v1386 = vmul.f32 %v1385, %v1379
      %v1387 = vadd.f32 %v1386, 1e-05
      %v1388 = vrsqrt.pop %v1387
      %v1389 = vmul.f32 %v1381, %v1388
      %v1390 = vlaneseq
      %v1391 = vshrl.u32 %v1390, 7
      %v1392 = vsub.s32 4, %v1391
      %v1393 = vrot.slane %v641, %v1392
      %v1394 = vmul.f32 %v1389, %v1393
      %v1395 = vlaneseq
      %v1396 = vshrl.u32 %v1395, 7
      %v1397 = vsub.s32 5, %v1396
      %v1398 = vrot.slane %v641, %v1397
      %v1399 = vadd.f32 %v1394, %v1398
      %v1400 = vpack.c.bf16 %v1399, %v1399
      %v1401 = vlaneseq
      %v1402 = vshrl.u32 %v1401, 7
      %v1403 = vsub.s32 2, %v1402
      %v1404 = vrot.slane %v641, %v1403
      %v1405 = vunpack.c.h.b16 %v629
      %v1406 = vunpack.c.h.b16 %v630
      %v1407 = vunpack.c.h.b16 %v631
      %v1408 = vunpack.c.h.b16 %v632
      %v1409 = vpack.c.b16 %v1406, %v1405
      %v1410 = vpack.c.b16 %v1408, %v1407
      %v1414 = vsel %vm660, %v1400, 0
      %1416 = vmatprep.subr.bf16.mxu0 0
      %1417 = vmatpush1.bf16.msra.mxu0 0
      %1418 = vmatprep.subr.bf16.mxu0 0
      %1419 = vmatpush1.bf16.msra.mxu0 0
      %1420 = vmatprep.subr.bf16.mxu0 0
      %1421 = vmatpush1.bf16.msra.mxu0 0
      %1422 = vmatprep.subr.bf16.mxu0 0
      %1423 = vmatpush1.bf16.msra.mxu0 0
      %1424 = vmatprep.subr.bf16.mxu0 0
      %1425 = vmatpush1.bf16.msra.mxu0 0
      %1426 = vmatprep.subr.bf16.mxu0 0
      %1427 = vmatpush1.bf16.msra.mxu0 0
      %1428 = vmatprep.subr.bf16.mxu0 0
      %1429 = vmatpush1.bf16.msra.mxu0 %v1410
      %1430 = vmatprep.subr.bf16.mxu0 0
      %1431 = vmatpush1.bf16.msra.mxu0 %v1409
      %1432 = vmatprep.subr.bf16.mxu0 0
      %1433 = vmatpush2.bf16.msra.mxu0 0
      %1434 = vmatprep.subr.bf16.mxu0 0
      %1435 = vmatpush2.bf16.msra.mxu0 0
      %1436 = vmatprep.subr.bf16.mxu0 0
      %1437 = vmatpush2.bf16.msra.mxu0 0
      %1438 = vmatprep.subr.bf16.mxu0 0
      %1439 = vmatpush2.bf16.msra.mxu0 0
      %1440 = vmatprep.subr.bf16.mxu0 0
      %1441 = vmatpush2.bf16.msra.mxu0 0
      %1442 = vmatprep.subr.bf16.mxu0 0
      %1443 = vmatpush2.bf16.msra.mxu0 0
      %1444 = vmatprep.subr.bf16.mxu0 0
      %1445 = vmatpush2.bf16.msra.mxu0 0
      %1446 = vmatprep.subr.bf16.mxu0 0
      %1447 = vmatpush2.bf16.msra.mxu0 0
      %1448 = vmatprep.mubr.bf16.mxu0 0
      %1449 = vmatmul.mubr.bf16.gmra.mxu0 %v1414
      %v1450 = vpop.f32.mrf.mxu0
      %v1451 = vadd.f32 %v1404, %v1450
      %v1452 = vpop.f32.mrf.mxu0
      %v1453 = vpop.f32.mrf.mxu0
      %v1454 = vpop.f32.mrf.mxu0
      %1455 = vdwg.mxu0
      %v1456 = vmul.f32 %v1451, 0.5
      %v1457 = vmul.f32 %v1451, 0.044715
      %v1458 = vmul.f32 %v1457, %v1451
      %v1459 = vmul.f32 %v1458, %v1451
      %v1460 = vadd.f32 %v1451, %v1459
      %v1461 = vmul.f32 %v1460, 0.7978846
      %v1462 = vtanh.pop %v1461
      %v1463 = vadd.f32 %v1462, 1.0
      %v1464 = vmul.f32 %v1456, %v1463
      %v1465 = vpack.c.bf16 %v1464, %v1464
      %v1474 = vunpack.c.l.b16 %v633
      %v1475 = vunpack.c.l.b16 %v634
      %v1476 = vunpack.c.l.b16 %v635
      %v1477 = vunpack.c.l.b16 %v636
      %v1478 = vunpack.c.l.b16 %v637
      %v1479 = vunpack.c.l.b16 %v638
      %v1480 = vunpack.c.l.b16 %v639
      %v1481 = vunpack.c.l.b16 %v640
      %v1482 = vpack.c.b16 %v1475, %v1474
      %v1483 = vpack.c.b16 %v1477, %v1476
      %v1484 = vpack.c.b16 %v1479, %v1478
      %v1485 = vpack.c.b16 %v1481, %v1480
      %vm1490 = vcmask 523264
      %v1492 = vsel %vm1490, %v1465, 0
      %1494 = vmatprep.subr.bf16.mxu0 0
      %1495 = vmatpush1.bf16.msra.mxu0 0
      %1496 = vmatprep.subr.bf16.mxu0 0
      %1497 = vmatpush1.bf16.msra.mxu0 0
      %1498 = vmatprep.subr.bf16.mxu0 0
      %1499 = vmatpush1.bf16.msra.mxu0 0
      %1500 = vmatprep.subr.bf16.mxu0 0
      %1501 = vmatpush1.bf16.msra.mxu0 0
      %1502 = vmatprep.subr.bf16.mxu0 0
      %1503 = vmatpush1.bf16.msra.mxu0 %v1485
      %1504 = vmatprep.subr.bf16.mxu0 0
      %1505 = vmatpush1.bf16.msra.mxu0 %v1484
      %1506 = vmatprep.subr.bf16.mxu0 0
      %1507 = vmatpush1.bf16.msra.mxu0 %v1483
      %1508 = vmatprep.subr.bf16.mxu0 0
      %1509 = vmatpush1.bf16.msra.mxu0 %v1482
      %1510 = vmatprep.subr.bf16.mxu0 0
      %1511 = vmatpush2.bf16.msra.mxu0 0
      %1512 = vmatprep.subr.bf16.mxu0 0
      %1513 = vmatpush2.bf16.msra.mxu0 0
      %1514 = vmatprep.subr.bf16.mxu0 0
      %1515 = vmatpush2.bf16.msra.mxu0 0
      %1516 = vmatprep.subr.bf16.mxu0 0
      %1517 = vmatpush2.bf16.msra.mxu0 0
      %1518 = vmatprep.subr.bf16.mxu0 0
      %1519 = vmatpush2.bf16.msra.mxu0 0
      %1520 = vmatprep.subr.bf16.mxu0 0
      %1521 = vmatpush2.bf16.msra.mxu0 0
      %1522 = vmatprep.subr.bf16.mxu0 0
      %1523 = vmatpush2.bf16.msra.mxu0 0
      %1524 = vmatprep.subr.bf16.mxu0 0
      %1525 = vmatpush2.bf16.msra.mxu0 0
      %1526 = vmatprep.mubr.bf16.mxu0 0
      %1527 = vmatmul.mubr.bf16.gmra.mxu0 %v1492
      %v1528 = vpop.f32.mrf.mxu0
      %v1529 = vadd.f32 0.0, %v1528
      %v1530 = vpop.f32.mrf.mxu0
      %v1531 = vpop.f32.mrf.mxu0
      %v1532 = vpop.f32.mrf.mxu0
      %1533 = vdwg.mxu0
      %v1534 = vadd.f32 %v1399, %v1529
      %v1535 = vlaneseq
      %v1536 = vshrl.u32 %v1535, 7
      %v1537 = vsub.s32 3, %v1536
      %v1538 = vrot.slane %v641, %v1537
      %v1539 = vadd.f32 %v1534, %v1538
      %v1540 = vsel %vm660, %v1539, 0.0
      %1541 = vadd.xlane.f32.xlu0 %v1540
      %v1542 = vpop.xlane.xlu0 %1541
      %v1543 = vmul.f32 %v1542, %v1379
      %v1544 = vsub.f32 %v1539, %v1543
      %v1545 = vmul.f32 %v1544, %v1544
      %v1546 = vsel %vm660, %v1545, 0.0
      %1547 = vadd.xlane.f32.xlu0 %v1546
      %v1548 = vpop.xlane.xlu0 %1547
      %v1549 = vmul.f32 %v1548, %v1379
      %v1550 = vadd.f32 %v1549, 1e-05
      %v1551 = vrsqrt.pop %v1550
      %v1552 = vmul.f32 %v1544, %v1551
      %v1553 = vlaneseq
      %v1554 = vshrl.u32 %v1553, 7
      %v1555 = vsub.s32 6, %v1554
      %v1556 = vrot.slane %v641, %v1555
      %v1557 = vmul.f32 %v1552, %v1556
      %v1558 = vlaneseq
      %v1559 = vshrl.u32 %v1558, 7
      %v1560 = vsub.s32 7, %v1559
      %v1561 = vrot.slane %v641, %v1560
      %v1562 = vadd.f32 %v1557, %v1561
      %1563 = vst.msk [vmem:[#allocation2] sm:$0xff] %vm660, %v1562
      %p1564 = scmp.eq.s32.totalorder %s29, 1
      // Predicated region
      $region77: #{forward.1} parent=71 // pred_check
        %p1565 = pneg %p1564
      $region78: #{forward.1} parent=71 // pred_check_branch
        %1567 = sbr.rel (%p1565) target = $region80
      $region79: #{forward.1} parent=71 // pred_region
        %v1568 = vld [vmem:[%s9] sm:$0xf]
        %v1569 = vld [vmem:[%s9 + $0x4] sm:$0xf]
        %v1570 = vld [vmem:[%s9 + $0x8] sm:$0xf]
        %v1571 = vld [vmem:[%s9 + $0xc] sm:$0xf]
        %v1572 = vpack.c.bf16 %v1562, %v1562
        %v1573 = vld [vmem:[%s9 + $0x10] sm:$0xf]
        %v1574 = vld [vmem:[%s9 + $0x14] sm:$0xf]
        %v1575 = vld [vmem:[%s9 + $0x18] sm:$0xf]
        %v1576 = vld [vmem:[%s9 + $0x1c] sm:$0xf]
        %v1581 = vunpack.c.l.b16 %v1573
        %v1582 = vunpack.c.l.b16 %v1574
        %v1583 = vunpack.c.l.b16 %v1575
        %v1584 = vunpack.c.l.b16 %v1576
        %v1585 = vpack.c.b16 %v1582, %v1581
        %v1586 = vpack.c.b16 %v1584, %v1583
        %1589 = vmatprep.subr.bf16.mxu0 0
        %1590 = vmatpush1.bf16.msra.mxu0 0
        %1591 = vmatprep.subr.bf16.mxu0 0
        %1592 = vmatpush1.bf16.msra.mxu0 0
        %1593 = vmatprep.subr.bf16.mxu0 0
        %1594 = vmatpush1.bf16.msra.mxu0 0
        %1595 = vmatprep.subr.bf16.mxu0 0
        %1596 = vmatpush1.bf16.msra.mxu0 0
        %1597 = vmatprep.subr.bf16.mxu0 0
        %1598 = vmatpush1.bf16.msra.mxu0 0
        %1599 = vmatprep.subr.bf16.mxu0 0
        %1600 = vmatpush1.bf16.msra.mxu0 0
        %1601 = vmatprep.subr.bf16.mxu0 0
        %1602 = vmatpush1.bf16.msra.mxu0 %v1586
        %1603 = vmatprep.subr.bf16.mxu0 0
        %1604 = vmatpush1.bf16.msra.mxu0 %v1585
        %1605 = vmatprep.subr.bf16.mxu0 0
        %1606 = vmatpush2.bf16.msra.mxu0 0
        %1607 = vmatprep.subr.bf16.mxu0 0
        %1608 = vmatpush2.bf16.msra.mxu0 0
        %1609 = vmatprep.subr.bf16.mxu0 0
        %1610 = vmatpush2.bf16.msra.mxu0 0
        %1611 = vmatprep.subr.bf16.mxu0 0
        %1612 = vmatpush2.bf16.msra.mxu0 0
        %1613 = vmatprep.subr.bf16.mxu0 0
        %1614 = vmatpush2.bf16.msra.mxu0 0
        %1615 = vmatprep.subr.bf16.mxu0 0
        %1616 = vmatpush2.bf16.msra.mxu0 0
        %1617 = vmatprep.subr.bf16.mxu0 0
        %1618 = vmatpush2.bf16.msra.mxu0 0
        %1619 = vmatprep.subr.bf16.mxu0 0
        %1620 = vmatpush2.bf16.msra.mxu0 0
        %1621 = vmatprep.mubr.bf16.mxu0 0
        %1622 = vmatmul.mubr.bf16.gmra.mxu0 %v662
        %v1623 = vpop.f32.mrf.mxu0
        %v1624 = vadd.f32 0.0, %v1623
        %v1625 = vpop.f32.mrf.mxu0
        %v1626 = vpop.f32.mrf.mxu0
        %v1627 = vpop.f32.mrf.mxu0
        %1628 = vdwg.mxu0
        %v1633 = vunpack.c.l.b16 %v1568
        %v1634 = vunpack.c.l.b16 %v1569
        %v1635 = vunpack.c.l.b16 %v1570
        %v1636 = vunpack.c.l.b16 %v1571
        %v1637 = vpack.c.b16 %v1634, %v1633
        %v1638 = vpack.c.b16 %v1636, %v1635
        %v1642 = vsel %vm660, %v1572, 0
        %1644 = vmatprep.subr.bf16.mxu0 0
        %1645 = vmatpush1.bf16.msra.mxu0 0
        %1646 = vmatprep.subr.bf16.mxu0 0
        %1647 = vmatpush1.bf16.msra.mxu0 0
        %1648 = vmatprep.subr.bf16.mxu0 0
        %1649 = vmatpush1.bf16.msra.mxu0 0
        %1650 = vmatprep.subr.bf16.mxu0 0
        %1651 = vmatpush1.bf16.msra.mxu0 0
        %1652 = vmatprep.subr.bf16.mxu0 0
        %1653 = vmatpush1.bf16.msra.mxu0 0
        %1654 = vmatprep.subr.bf16.mxu0 0
        %1655 = vmatpush1.bf16.msra.mxu0 0
        %1656 = vmatprep.subr.bf16.mxu0 0
        %1657 = vmatpush1.bf16.msra.mxu0 %v1638
        %1658 = vmatprep.subr.bf16.mxu0 0
        %1659 = vmatpush1.bf16.msra.mxu0 %v1637
        %1660 = vmatprep.subr.bf16.mxu0 0
        %1661 = vmatpush2.bf16.msra.mxu0 0
        %1662 = vmatprep.subr.bf16.mxu0 0
        %1663 = vmatpush2.bf16.msra.mxu0 0
        %1664 = vmatprep.subr.bf16.mxu0 0
        %1665 = vmatpush2.bf16.msra.mxu0 0
        %1666 = vmatprep.subr.bf16.mxu0 0
        %1667 = vmatpush2.bf16.msra.mxu0 0
        %1668 = vmatprep.subr.bf16.mxu0 0
        %1669 = vmatpush2.bf16.msra.mxu0 0
        %1670 = vmatprep.subr.bf16.mxu0 0
        %1671 = vmatpush2.bf16.msra.mxu0 0
        %1672 = vmatprep.subr.bf16.mxu0 0
        %1673 = vmatpush2.bf16.msra.mxu0 0
        %1674 = vmatprep.subr.bf16.mxu0 0
        %1675 = vmatpush2.bf16.msra.mxu0 0
        %1676 = vmatprep.mubr.bf16.mxu0 0
        %1677 = vmatmul.mubr.bf16.gmra.mxu0 %v1642
        %v1678 = vpop.f32.mrf.mxu0
        %v1679 = vadd.f32 %v1624, %v1678
        %v1680 = vpop.f32.mrf.mxu0
        %v1681 = vpop.f32.mrf.mxu0
        %v1682 = vpop.f32.mrf.mxu0
        %1683 = vdwg.mxu0
        %v1684 = vld [vmem:[%s10] sm:$0x1]
        %v1686 = vlaneseq
        %v1687 = vshrl.u32 %v1686, 7
        %v1688 = vsub.s32 0, %v1687
        %v1689 = vrot.slane %v1684, %v1688
        %v1691 = vadd.f32 %v1679, %v1689
        %v1692 = vlaneseq
        %v1693 = vand.u32 %v1692, 127
        %vm1694 = vcmp.eq.s32.totalorder %v1693, 0
        %v1695 = vld [vmem:[%s578] sm:$0xff]
        %vm1696 = vcmp.eq.s32.totalorder %v1693, 1
        %v1697 = vld [vmem:[%s582] sm:$0xff]
        %1698 = vset.pattern.permute.xlu0 0
        %1699 = vperm.xlu0 %1698, %v1697
        %v1700 = vpop.permute.xlu0 %1699
        %v1701 = vsel %vm1696, %v1700, 0
        %1702 = vset.pattern.permute.xlu0 0
        %1703 = vperm.xlu0 %1702, %v1695
        %v1704 = vpop.permute.xlu0 %1703
        %v1705 = vsel %vm1694, %v1704, %v1701
        %vm1706 = vcmp.eq.s32.totalorder %v1705, 0
        %v1707 = vsel %vm1706, %v1691, -inf
        %1708 = vst [vmem:[%s586] sm:$0xff] %v1707
      $region80: #{forward.1} parent=71 // pred_fallthru
        _
      %p1709 = scmp.lt.s32.totalorder %s28, 1
      %s1710 = scalar_select %p1709, %s28, 1
      %s1711 = smul.addr %s1710, 8
      %s1712 = scalar_lea.vmem %s13, %s1711
      // Predicated region
      $region81: #{forward.1} parent=71 // pred_check
        %p1713 = pneg %p372
      $region82: #{forward.1} parent=71 // pred_check_branch
        %1715 = sbr.rel (%p1713) target = $region84
      $region83: #{forward.1} parent=71 // pred_region
        _
      $region84: #{forward.1} parent=71 // pred_fallthru
        _
    $region72: #{forward.1} parent=5 // pred_fallthru
      _
    %p1716 = scmp.le.s32.totalorder 2, %s19
    // Predicated region
    $region85: #{forward.1} parent=5 // pred_check
      %p1717 = pneg %p1716
    $region86: #{forward.1} parent=5 // pred_check_branch
      %1719 = sbr.rel (%p1717) target = $region88
    $region87: #{forward.1} parent=5 // pred_region
      %s1720 = ssub.s32 %s19, 2
      // Predicated region
      $region89: #{forward.1} parent=87 // pred_check
        %p1721 = pneg %p378
      $region90: #{forward.1} parent=87 // pred_check_branch
        %1723 = sbr.rel (%p1721) target = $region92
      $region91: #{forward.1} parent=87 // pred_region
        %p1724 = scmp.lt.s32.totalorder %s30, 1
        %s1725 = scalar_select %p1724, %s30, 1
        %s1726 = smul.addr %s1725, 8
        %s1727 = scalar_lea.vmem %s13, %s1726
      $region92: #{forward.1} parent=87 // pred_fallthru
        _
    $region88: #{forward.1} parent=5 // pred_fallthru
      _
  $region6: #{forward.1} parent=0 // loop_footer
    %s23 = sadd.s32 1, %s19
  $region7: #{forward.1} parent=0 // loop_footer_branch
    %18 = sbr.rel target = $region3
  $region8: #{forward.1} parent=0 // loop_exit
    _

</llo_original>
